<compile_context>
chip_gen: v7x
topology: tpu7x:2x2x1
jax: 0.10.0
libtpu: 0.0.40
codegen_flags: <defaults>
</compile_context>

<pallas_src>
import functools

import numpy as np
import jax
import jax.numpy as jnp
from jax.experimental import pallas as pl
from jax.experimental.pallas import tpu as pltpu


def _squeeze_kernel(x_ref, pw_ref, o_ref, *, f, precision):
    # x_ref : (cblk, hband, f*W)   lane-dense view; x_ref[c, i, s1*W + w] = x[c, i*f+s1, w]
    # pw_ref: (W, W)               resident 0/1 permutation, pw[w, s2*Ws+j] = (w == j*f+s2)
    # o_ref : (cblk, f*f, hband, Ws)
    cblk, hband, fW = x_ref.shape
    W = fW // f
    Ws = W // f

    pw = pw_ref[...]
    tile = x_ref[...]                                    # (cblk, hband, f*W)

    for s1 in range(f):                                  # f is tiny (2) -> static unroll
        # H-row select for this s1 is a contiguous lane slice (no strides).
        rows = tile[:, :, s1 * W:(s1 + 1) * W]           # (cblk, hband, W)
        # Stack channels+rows into M for one fused MXU matmul per s1.
        rows2d = rows.reshape(cblk * hband, W).astype(pw.dtype)
        # Exact lane permutation: columns regrouped as [s2][j].
        perm = jnp.dot(rows2d, pw,
                       precision=precision,
                       preferred_element_type=jnp.float32)   # (cblk*hband, W)
        for s2 in range(f):
            plane = perm[:, s2 * Ws:(s2 + 1) * Ws]           # (cblk*hband, Ws)
            o_ref[:, s1 * f + s2, :, :] = (
                plane.reshape(cblk, hband, Ws).astype(o_ref.dtype))


def _pick_blocks(B, C, Hs, lane_w, itemsize, target_bytes=2 << 20):
    """Pick (channel_block, H_band) so blocks are ~target_bytes and the grid
    has >= 2 steps when possible (pipeline overlap / v7x dual TensorCores)."""
    row_bytes = lane_w * itemsize            # one (channel, Hs-row) of the lane-dense view
    plane_bytes = Hs * row_bytes             # one full channel per block
    if plane_bytes <= target_bytes:
        hband = Hs
        cblk = max(d for d in range(1, C + 1)
                   if C % d == 0 and d * plane_bytes <= target_bytes)
    else:
        # Single channel plane exceeds the budget: band over Hs (prefer mult-of-8 bands).
        cblk = 1
        cands = [d for d in range(1, Hs + 1)
                 if Hs % d == 0 and d * row_bytes <= target_bytes]
        pref = [d for d in cands if d % 8 == 0]
        hband = max(pref) if pref else (max(cands) if cands else 1)

    if B * (C // cblk) * (Hs // hband) < 2:
        if cblk > 1:
            cblk = max(d for d in range(1, C) if C % d == 0 and d <= C // 2)
        elif hband > 1:
            cands = [d for d in range(1, Hs) if Hs % d == 0 and d <= Hs // 2]
            pref = [d for d in cands if d % 8 == 0]
            hband = max(pref) if pref else max(cands)
    return cblk, hband


def glow_squeeze(x, squeezing_factor):
    f = int(squeezing_factor)
    B, C, H, W = x.shape
    if f == 1:
        return x
    assert H % f == 0 and W % f == 0, "H and W must be divisible by the squeezing factor"
    Hs, Ws = H // f, W // f

    # Exact-but-cheapest matmul config per dtype (0/1 RHS => both are bit-exact).
    if x.dtype == jnp.bfloat16:
        mm_dtype, precision = jnp.bfloat16, jax.lax.Precision.DEFAULT
    else:
        mm_dtype, precision = jnp.float32, jax.lax.Precision.HIGHEST

    # 0/1 column-permutation matrix: pw[w, s2*Ws + j] = 1 iff w == j*f + s2.
    o_idx = np.arange(W)
    src = (o_idx % Ws) * f + (o_idx // Ws)
    pw_np = np.zeros((W, W), dtype=np.float32)
    pw_np[src, o_idx] = 1.0
    pw = jnp.asarray(pw_np, dtype=mm_dtype)

    # Free flat-order view: xr[b, c, i, s1*W + w] == x[b, c, i*f + s1, w].
    xr = x.reshape(B, C, Hs, f * W)

    cblk, hband = _pick_blocks(B, C, Hs, f * W, x.dtype.itemsize)
    grid = (B, C // cblk, Hs // hband)

    nelem = B * C * H * W
    cost = pl.CostEstimate(
        flops=2 * nelem * W,                       # f matmuls of (cblk*hband, W) @ (W, W)
        transcendentals=0,
        bytes_accessed=2 * nelem * x.dtype.itemsize + W * W * pw.dtype.itemsize,
    )

    kernel = functools.partial(_squeeze_kernel, f=f, precision=precision)

    out5 = pl.pallas_call(
        kernel,
        out_shape=jax.ShapeDtypeStruct((B, C, f * f, Hs, Ws), x.dtype),
        grid_spec=pltpu.PrefetchScalarGridSpec(
            num_scalar_prefetch=0,
            grid=grid,
            in_specs=[
                # batch dim squeezed (None); full lane-dense rows per block.
                pl.BlockSpec((None, cblk, hband, f * W),
                             lambda b, cb, hb: (b, cb, hb, 0)),
                # permutation matrix: constant index_map -> fetched once, stays resident.
                pl.BlockSpec((W, W), lambda b, cb, hb: (0, 0)),
            ],
            out_specs=pl.BlockSpec((None, cblk, f * f, hband, Ws),
                                   lambda b, cb, hb: (b, cb, 0, hb, 0)),
        ),
        compiler_params=pltpu.CompilerParams(
            dimension_semantics=("parallel", "parallel", "parallel"),
            vmem_limit_bytes=32 * 1024 * 1024,
        ),
        cost_estimate=cost,
    )(xr, pw)

    # Free (layout-preserving) reshape to the NCHW view the module returns.
    return out5.reshape(B, C * f * f, Hs, Ws)


def glow_squeeze_ref(x, f):
    """Pure-JAX reference mirroring the PyTorch forward exactly."""
    B, C, H, W = x.shape
    h = x.reshape(B, C, H // f, f, W // f, f)
    h = jnp.transpose(h, (0, 1, 3, 5, 2, 4))
    return h.reshape(B, C * f * f, H // f, W // f)


if __name__ == "__main__":
    B, C, H, W, f = 2, 4, 16, 16, 2
    key = jax.random.PRNGKey(0)
    x = jax.random.normal(key, (B, C, H, W), dtype=jnp.float32)

    out = glow_squeeze(x, f)
    out = jax.block_until_ready(out)

    ref = glow_squeeze_ref(x, f)
    np.testing.assert_allclose(np.asarray(out), np.asarray(ref), rtol=1e-6, atol=1e-6)
    assert out.shape == (B, C * f * f, H // f, W // f)
    assert out.dtype == x.dtype

    print("KERNEL_OK")
</pallas_src>

<mosaic_0001>
module attributes {stable_mosaic.version = 11 : i64} {
  func.func @_squeeze_kernel(%arg0: i32, %arg1: i32, %arg2: i32, %arg3: memref<1x4x8x32xf32, #tpu.memory_space<vmem>>, %arg4: memref<16x16xf32, #tpu.memory_space<vmem>>, %arg5: memref<1x4x4x8x8xf32, #tpu.memory_space<vmem>>) attributes {dimension_semantics = [#tpu.dimension_semantics<parallel>, #tpu.dimension_semantics<parallel>, #tpu.dimension_semantics<parallel>], iteration_bounds = array<i64: 2, 1, 1>, scalar_prefetch = 0 : i64, scratch_operands = 0 : i64, tpu.core_type = #tpu.core_type<tc>, window_params = [{transform_indices = @transform_0, window_bounds = array<i64: 1, 4, 8, 32>}, {pipeline_mode = #tpu.pipeline_mode<synchronous>, transform_indices = @transform_1, window_bounds = array<i64: 16, 16>}, {transform_indices = @transform_2, window_bounds = array<i64: 1, 4, 4, 8, 8>}]} {
    %c0 = arith.constant 0 : index
    %c0_0 = arith.constant 0 : index
    %0 = vector.load %arg4[%c0, %c0_0] : memref<16x16xf32, #tpu.memory_space<vmem>>, vector<16x16xf32>
    %c0_1 = arith.constant 0 : index
    %c0_2 = arith.constant 0 : index
    %c0_3 = arith.constant 0 : index
    %c0_4 = arith.constant 0 : index
    %1 = vector.load %arg3[%c0_1, %c0_2, %c0_3, %c0_4] : memref<1x4x8x32xf32, #tpu.memory_space<vmem>>, vector<1x4x8x32xf32>
    %2 = vector.shape_cast %1 : vector<1x4x8x32xf32> to vector<4x8x32xf32>
    %3 = vector.extract_strided_slice %2 {offsets = [0, 0, 0], sizes = [4, 8, 16], strides = [1, 1, 1]} : vector<4x8x32xf32> to vector<4x8x16xf32>
    %4 = vector.shape_cast %3 : vector<4x8x16xf32> to vector<32x16xf32>
    %cst = arith.constant dense<0.000000e+00> : vector<32x16xf32>
    %5 = tpu.matmul %4, %0, %cst {dimension_numbers = #tpu.dot_dimension_numbers<[1], [0], [0], [1], [0, 0, 1, 1], [], []>, precision = #tpu.contract_precision<fp32>} : vector<32x16xf32>, vector<16x16xf32>, vector<32x16xf32> -> vector<32x16xf32>
    %6 = vector.extract_strided_slice %5 {offsets = [0, 0], sizes = [32, 8], strides = [1, 1]} : vector<32x16xf32> to vector<32x8xf32>
    %7 = vector.shape_cast %6 : vector<32x8xf32> to vector<4x8x8xf32>
    %c0_5 = arith.constant 0 : index
    %c0_6 = arith.constant 0 : index
    %c0_7 = arith.constant 0 : index
    %c0_8 = arith.constant 0 : index
    %c0_9 = arith.constant 0 : index
    %8 = vector.load %arg5[%c0_5, %c0_6, %c0_7, %c0_8, %c0_9] : memref<1x4x4x8x8xf32, #tpu.memory_space<vmem>>, vector<1x4x1x8x8xf32>
    %9 = vector.shape_cast %8 : vector<1x4x1x8x8xf32> to vector<4x8x8xf32>
    %10 = vector.shape_cast %7 : vector<4x8x8xf32> to vector<1x4x1x8x8xf32>
    tpu.vector_store %arg5[%c0_5, %c0_6, %c0_7, %c0_8, %c0_9], %10 {strides = array<i32>} : memref<1x4x4x8x8xf32, #tpu.memory_space<vmem>>, vector<1x4x1x8x8xf32>,
    %11 = vector.extract_strided_slice %5 {offsets = [0, 8], sizes = [32, 8], strides = [1, 1]} : vector<32x16xf32> to vector<32x8xf32>
    %12 = vector.shape_cast %11 : vector<32x8xf32> to vector<4x8x8xf32>
    %c0_10 = arith.constant 0 : index
    %c0_11 = arith.constant 0 : index
    %c1 = arith.constant 1 : index
    %c0_12 = arith.constant 0 : index
    %c0_13 = arith.constant 0 : index
    %13 = vector.load %arg5[%c0_10, %c0_11, %c1, %c0_12, %c0_13] : memref<1x4x4x8x8xf32, #tpu.memory_space<vmem>>, vector<1x4x1x8x8xf32>
    %14 = vector.shape_cast %13 : vector<1x4x1x8x8xf32> to vector<4x8x8xf32>
    %15 = vector.shape_cast %12 : vector<4x8x8xf32> to vector<1x4x1x8x8xf32>
    tpu.vector_store %arg5[%c0_10, %c0_11, %c1, %c0_12, %c0_13], %15 {strides = array<i32>} : memref<1x4x4x8x8xf32, #tpu.memory_space<vmem>>, vector<1x4x1x8x8xf32>,
    %16 = vector.extract_strided_slice %2 {offsets = [0, 0, 16], sizes = [4, 8, 16], strides = [1, 1, 1]} : vector<4x8x32xf32> to vector<4x8x16xf32>
    %17 = vector.shape_cast %16 : vector<4x8x16xf32> to vector<32x16xf32>
    %cst_14 = arith.constant dense<0.000000e+00> : vector<32x16xf32>
    %18 = tpu.matmul %17, %0, %cst_14 {dimension_numbers = #tpu.dot_dimension_numbers<[1], [0], [0], [1], [0, 0, 1, 1], [], []>, precision = #tpu.contract_precision<fp32>} : vector<32x16xf32>, vector<16x16xf32>, vector<32x16xf32> -> vector<32x16xf32>
    %19 = vector.extract_strided_slice %18 {offsets = [0, 0], sizes = [32, 8], strides = [1, 1]} : vector<32x16xf32> to vector<32x8xf32>
    %20 = vector.shape_cast %19 : vector<32x8xf32> to vector<4x8x8xf32>
    %c0_15 = arith.constant 0 : index
    %c0_16 = arith.constant 0 : index
    %c2 = arith.constant 2 : index
    %c0_17 = arith.constant 0 : index
    %c0_18 = arith.constant 0 : index
    %21 = vector.load %arg5[%c0_15, %c0_16, %c2, %c0_17, %c0_18] : memref<1x4x4x8x8xf32, #tpu.memory_space<vmem>>, vector<1x4x1x8x8xf32>
    %22 = vector.shape_cast %21 : vector<1x4x1x8x8xf32> to vector<4x8x8xf32>
    %23 = vector.shape_cast %20 : vector<4x8x8xf32> to vector<1x4x1x8x8xf32>
    tpu.vector_store %arg5[%c0_15, %c0_16, %c2, %c0_17, %c0_18], %23 {strides = array<i32>} : memref<1x4x4x8x8xf32, #tpu.memory_space<vmem>>, vector<1x4x1x8x8xf32>,
    %24 = vector.extract_strided_slice %18 {offsets = [0, 8], sizes = [32, 8], strides = [1, 1]} : vector<32x16xf32> to vector<32x8xf32>
    %25 = vector.shape_cast %24 : vector<32x8xf32> to vector<4x8x8xf32>
    %c0_19 = arith.constant 0 : index
    %c0_20 = arith.constant 0 : index
    %c3 = arith.constant 3 : index
    %c0_21 = arith.constant 0 : index
    %c0_22 = arith.constant 0 : index
    %26 = vector.load %arg5[%c0_19, %c0_20, %c3, %c0_21, %c0_22] : memref<1x4x4x8x8xf32, #tpu.memory_space<vmem>>, vector<1x4x1x8x8xf32>
    %27 = vector.shape_cast %26 : vector<1x4x1x8x8xf32> to vector<4x8x8xf32>
    %28 = vector.shape_cast %25 : vector<4x8x8xf32> to vector<1x4x1x8x8xf32>
    tpu.vector_store %arg5[%c0_19, %c0_20, %c3, %c0_21, %c0_22], %28 {strides = array<i32>} : memref<1x4x4x8x8xf32, #tpu.memory_space<vmem>>, vector<1x4x1x8x8xf32>,
    return
  }
  func.func @transform_0(%arg0: i32, %arg1: i32, %arg2: i32) -> (i32, i32, i32, i32) {
    %c0_i32 = arith.constant 0 : i32
    %c0_i32_0 = arith.constant 0 : i32
    return %arg0, %arg1, %arg2, %c0_i32 : i32, i32, i32, i32
  }
  func.func @transform_1(%arg0: i32, %arg1: i32, %arg2: i32) -> (i32, i32) {
    %c0_i32 = arith.constant 0 : i32
    %c0_i32_0 = arith.constant 0 : i32
    %c0_i32_1 = arith.constant 0 : i32
    return %c0_i32, %c0_i32_0 : i32, i32
  }
  func.func @transform_2(%arg0: i32, %arg1: i32, %arg2: i32) -> (i32, i32, i32, i32, i32) {
    %c0_i32 = arith.constant 0 : i32
    %c0_i32_0 = arith.constant 0 : i32
    %c0_i32_1 = arith.constant 0 : i32
    return %arg0, %arg1, %c0_i32, %arg2, %c0_i32_0 : i32, i32, i32, i32, i32
  }
}

</mosaic_0001>

<llo_original>
// kernel: tpu_custom_call.1
$region0: #{tpu_custom_call.1}
  #allocation0 [shape = 'u32[]', space=smem, size = 0x4, offset = 0x4, fixed_abs, tag = 'smem constant byte address 0x4 - core index']
  #allocation1 [shape = 'u32[144,128]{1,0:T(1,128)}', space=vmem, size = 0x12000, scoped, tag = 'internal scratch']
  %s0 = inlined_call_operand.hbm [shape: f32[2,4,8,32], index: 0, kind: input, shape index: {}]
  %s1 = inlined_call_operand.hbm [shape: f32[16,16], index: 1, kind: input, shape index: {}]
  %s2 = inlined_call_operand.hbm [shape: f32[2,4,4,8,8], index: 2, kind: output, shape index: {}]
  %s3 = sld [smem:[#allocation0]]
  $region49: #{tpu_custom_call.1} parent=0
    _
  %s5 = ssub.s32 1, %s3
  %s6 = scalar_select 0, %s5, %s3
  $region1: #{tpu_custom_call.1} parent=0
    #allocation2 [shape = 'u8[32768]{0}', space=vmem, size = 0x8000, scoped, tag = 'input window, operand 0']
    #allocation3 [shape = 's32[2]{0}', space=sflag, size = 0x8, scoped, tag = 'scoped memory for tpu_custom_call.1']
    #allocation4 [shape = 's32[2]{0}', space=sflag, size = 0x8, scoped, tag = 'scoped memory for tpu_custom_call.1']
    #allocation5 [shape = 'u8[8192]{0}', space=vmem, size = 0x2000, scoped, tag = 'input window, operand 1, single buffered']
    #allocation6 [shape = 's32[1]{0}', space=sflag, size = 0x4, scoped, tag = 'scoped memory for tpu_custom_call.1']
    #allocation7 [shape = 'u8[131072]{0}', space=vmem, size = 0x20000, scoped, tag = 'output window, operand 0']
    %7 = vsyncpa [#allocation3], 0
    %s8 = scalar_lea.sflag [#allocation3], 1
    %9 = vsyncpa %s8, 0
    %10 = vsyncpa [#allocation6], 0
    %11 = vsyncpa [#allocation4], 0
    %s12 = scalar_lea.sflag [#allocation4], 1
    %13 = vsyncpa %s12, 0
    loop: start=0, step=1, limit=4
    $region2: #{tpu_custom_call.1} parent=1 // loop_pre_header
      _
    $region3: #{tpu_custom_call.1} parent=1 // loop_header
      %s15 = sphi 0, %s19
      %p16 = scmp.ge.s32.totalorder %s15, 4
      %s22 = sphi 0, %s41
      %s23 = sphi 0, %s37
      %s24 = sphi 0, %s33
      %s25 = sphi 0, %s22
      %s26 = sphi 0, %s23
      %s27 = sphi 0, %s24
      %s28 = sphi 0, %s25
      %s29 = sphi 0, %s26
      %s30 = sphi 0, %s27
      %s48 = sphi 0, %s50
      %s51 = sphi 0, %s48
      %s52 = sphi 0, %s51
      %s68 = sphi 0, %s52
      %s72 = sphi 0, %s72
      %s74 = sphi 0, %s72
      %s75 = sphi 0, %s74
      %s89 = sphi 0, %s75
      %s99 = sphi 0, %s101
      %s102 = sphi 0, %s99
      %s103 = sphi 0, %s102
      %s119 = sphi 0, %s103
    $region4: #{tpu_custom_call.1} parent=1 // loop_header_branch
      %18 = sbr.rel (%p16) target = $region8
    $region5: #{tpu_custom_call.1} parent=1 // loop_body
      %s20 = ssub.s32 %s15, 1
      %s21 = ssub.s32 %s15, 2
      %s31 = sadd.s32 1, %s24
      %p32 = scmp.ge.s32.totalorder %s31, 1
      %s33 = scalar_select %p32, 0, %s31
      %s34 = sadd.s32 1, %s23
      %s35 = scalar_select %p32, %s34, %s23
      %p36 = scmp.ge.s32.totalorder %s35, 1
      %s37 = scalar_select %p36, 0, %s35
      %s38 = sadd.s32 1, %s22
      %s39 = scalar_select %p36, %s38, %s22
      %p40 = scmp.ge.s32.totalorder %s39, 2
      %s41 = scalar_select %p40, 0, %s39
      %s42 = ssub.s32 %s22, %s41
      %s43 = ssub.s32 %s23, %s37
      %s44 = sor.u32 %s42, %s43
      %s45 = ssub.s32 %s24, %s33
      %s46 = sor.u32 %s44, %s45
      %p47 = scmp.eq.s32.totalorder %s46, 0
      %s49 = sadd.s32 %s48, 1
      %s50 = scalar_select %p47, %s48, %s49
      %p53 = pneg %p47
      %p54 = scmp.eq.s32.totalorder %s15, 1
      %p55 = por %p53, %p54
      %p56 = scmp.ne.s32.totalorder %s48, %s51
      %p57 = scmp.eq.s32.totalorder %s15, 0
      %p58 = por %p56, %p57
      %p59 = scmp.ne.s32.totalorder %s48, %s51
      %p60 = scmp.eq.s32.totalorder %s20, 1
      %p61 = por %p59, %p60
      %p62 = scmp.ne.s32.totalorder %s51, %s52
      %p63 = scmp.eq.s32.totalorder %s20, 0
      %p64 = por %p62, %p63
      %p65 = scmp.ne.s32.totalorder %s51, %s52
      %p66 = scmp.eq.s32.totalorder %s21, 1
      %p67 = por %p65, %p66
      %p69 = scmp.ne.s32.totalorder %s52, %s68
      %p70 = scmp.eq.s32.totalorder %s21, 0
      %p71 = por %p69, %p70
      %s73 = sadd.s32 %s72, 1
      %p76 = scmp.eq.s32.totalorder %s15, 1
      %p77 = scmp.ne.s32.totalorder %s72, %s74
      %p78 = scmp.eq.s32.totalorder %s15, 0
      %p79 = por %p77, %p78
      %p80 = scmp.ne.s32.totalorder %s72, %s74
      %p81 = scmp.eq.s32.totalorder %s20, 1
      %p82 = por %p80, %p81
      %p83 = scmp.ne.s32.totalorder %s74, %s75
      %p84 = scmp.eq.s32.totalorder %s20, 0
      %p85 = por %p83, %p84
      %p86 = scmp.ne.s32.totalorder %s74, %s75
      %p87 = scmp.eq.s32.totalorder %s21, 1
      %p88 = por %p86, %p87
      %p90 = scmp.ne.s32.totalorder %s75, %s89
      %p91 = scmp.eq.s32.totalorder %s21, 0
      %p92 = por %p90, %p91
      %s93 = ssub.s32 %s22, %s41
      %s94 = ssub.s32 %s23, %s37
      %s95 = sor.u32 %s93, %s94
      %s96 = ssub.s32 %s24, %s33
      %s97 = sor.u32 %s95, %s96
      %p98 = scmp.eq.s32.totalorder %s97, 0
      %s100 = sadd.s32 %s99, 1
      %s101 = scalar_select %p98, %s99, %s100
      %p104 = pneg %p98
      %p105 = scmp.eq.s32.totalorder %s15, 1
      %p106 = por %p104, %p105
      %p107 = scmp.ne.s32.totalorder %s99, %s102
      %p108 = scmp.eq.s32.totalorder %s15, 0
      %p109 = por %p107, %p108
      %p110 = scmp.ne.s32.totalorder %s99, %s102
      %p111 = scmp.eq.s32.totalorder %s20, 1
      %p112 = por %p110, %p111
      %p113 = scmp.ne.s32.totalorder %s102, %s103
      %p114 = scmp.eq.s32.totalorder %s20, 0
      %p115 = por %p113, %p114
      %p116 = scmp.ne.s32.totalorder %s102, %s103
      %p117 = scmp.eq.s32.totalorder %s21, 1
      %p118 = por %p116, %p117
      %p120 = scmp.ne.s32.totalorder %s103, %s119
      %p121 = scmp.eq.s32.totalorder %s21, 0
      %p122 = por %p120, %p121
      %p123 = scmp.le.s32.totalorder 1, %s15
      %p124 = scmp.lt.s32.totalorder %s15, 3
      %p125 = pnand %p123, %p124
      %p126 = pneg %p125
      // Predicated region
      $region9: #{tpu_custom_call.1} parent=5 // pred_check
        _
      $region10: #{tpu_custom_call.1} parent=5 // pred_check_branch
        %128 = sbr.rel (%p125) target = $region12
      $region11: #{tpu_custom_call.1} parent=5 // pred_region
        %s129 = ssub.s32 %s15, 1
        // Predicated region
        $region13: #{tpu_custom_call.1} parent=11 // pred_check
          %p130 = pneg %p85
        $region14: #{tpu_custom_call.1} parent=11 // pred_check_branch
          %132 = sbr.rel (%p130) target = $region16
        $region15: #{tpu_custom_call.1} parent=11 // pred_region
          %s134 = ssub.s32 256, 256
          %135 = vsyncadd [#allocation6], %s134
          %s136 = sshll.u32 [#allocation5], 4
          %s137 = int_to_ptr.vmem [resolvable:$true] %s136
          %142 = dma.hbm_to_vmem [thread:$0]  %s1, 256, %s137, [#allocation6], 128, 128, 8
        $region16: #{tpu_custom_call.1} parent=11 // pred_fallthru
          _
      $region12: #{tpu_custom_call.1} parent=5 // pred_fallthru
        _
      %p143 = scmp.lt.s32.totalorder %s15, 2
      // Predicated region
      $region17: #{tpu_custom_call.1} parent=5 // pred_check
        %p144 = pneg %p143
      $region18: #{tpu_custom_call.1} parent=5 // pred_check_branch
        %146 = sbr.rel (%p144) target = $region20
      $region19: #{tpu_custom_call.1} parent=5 // pred_region
        // Predicated region
        $region21: #{tpu_custom_call.1} parent=19 // pred_check
          %p147 = pneg %p58
        $region22: #{tpu_custom_call.1} parent=19 // pred_check_branch
          %149 = sbr.rel (%p147) target = $region24
        $region23: #{tpu_custom_call.1} parent=19 // pred_region
          %s150 = sand.u32 %s48, 1
          %s151 = scalar_lea.sflag [#allocation3], %s150
          %s152 = sand.u32 %s48, 1
          %s153 = smul.addr %s152, 32
          %s154 = scalar_lea.vmem [#allocation2], %s153
          %s155 = smul.u32 4, %s23
          %s157 = ssub.s32 512, 512
          %158 = vsyncadd %s151, %s157
          %s159 = sadd.s32 %s24, %s155
          %s160 = smul.addr %s22, 4
          %s161 = sadd.s32 %s159, %s160
          %s162 = smul.addr %s161, 128
          %s163 = scalar_lea.hbm %s0, %s162
          %s164 = sshll.u32 %s154, 4
          %s165 = int_to_ptr.vmem [resolvable:$true] %s164
          %170 = dma.hbm_to_vmem [thread:$0]  %s163, 512, %s165, %s151, 128, 128, 8
        $region24: #{tpu_custom_call.1} parent=19 // pred_fallthru
          _
      $region20: #{tpu_custom_call.1} parent=5 // pred_fallthru
        _
      %p171 = scmp.le.s32.totalorder 1, %s15
      %p172 = scmp.lt.s32.totalorder %s15, 3
      %p173 = pnand %p171, %p172
      %p174 = pneg %p173
      // Predicated region
      $region25: #{tpu_custom_call.1} parent=5 // pred_check
        _
      $region26: #{tpu_custom_call.1} parent=5 // pred_check_branch
        %176 = sbr.rel (%p173) target = $region28
      $region27: #{tpu_custom_call.1} parent=5 // pred_region
        %s177 = ssub.s32 %s15, 1
        %s178 = sand.u32 %s51, 1
        %s179 = scalar_lea.sflag [#allocation3], %s178
        %s180 = sand.u32 %s51, 1
        %s181 = smul.addr %s180, 32
        %s182 = scalar_lea.vmem [#allocation2], %s181
        // Predicated region
        $region29: #{tpu_custom_call.1} parent=27 // pred_check
          %p183 = pneg %p64
        $region30: #{tpu_custom_call.1} parent=27 // pred_check_branch
          %185 = sbr.rel (%p183) target = $region32
        $region31: #{tpu_custom_call.1} parent=27 // pred_region
          %186 = dma.done %s179, 512
        $region32: #{tpu_custom_call.1} parent=27 // pred_fallthru
          _
        // Predicated region
        $region33: #{tpu_custom_call.1} parent=27 // pred_check
          %p187 = pneg %p85
        $region34: #{tpu_custom_call.1} parent=27 // pred_check_branch
          %189 = sbr.rel (%p187) target = $region36
        $region35: #{tpu_custom_call.1} parent=27 // pred_region
          %190 = dma.done [#allocation6], 256
        $region36: #{tpu_custom_call.1} parent=27 // pred_fallthru
          _
        %s191 = sand.u32 %s51, 1
        %s192 = scalar_lea.sflag [#allocation3], %s191
        %s193 = sand.u32 %s51, 1
        %s194 = smul.addr %s193, 32
        %s195 = scalar_lea.vmem [#allocation2], %s194
        %p196 = pneg %p64
        %p197 = pneg %p61
        %p198 = pneg %p85
        %p199 = pneg %p82
        %p200 = pneg %p115
        %p201 = pneg %p112
        %s202 = sand.u32 %s102, 1
        %s203 = scalar_lea.sflag [#allocation4], %s202
        %s204 = sand.u32 %s102, 1
        %s205 = smul.addr %s204, 128
        %s206 = scalar_lea.vmem [#allocation7], %s205
        %s207 = smul.u32 4, %s26
        %s208 = smul.u32 4, %s26
        %v209 = vld [vmem:[#allocation5] sm:$0xff]
        %v210 = vld [vmem:[#allocation5 + $0x8] sm:$0xff]
        %v211 = vld [vmem:[%s182] sm:$0xff]
        %v212 = vld [vmem:[%s182 + $0x8] sm:$0xff]
        %v213 = vld [vmem:[%s182 + $0x10] sm:$0xff]
        %v214 = vld [vmem:[%s182 + $0x18] sm:$0xff]
        %vm215 = vcmask 130048
        %v217 = vsel %vm215, %v211, 0
        %v220 = vsel %vm215, %v212, 0
        %v223 = vsel %vm215, %v213, 0
        %v226 = vsel %vm215, %v214, 0
        %228 = vmatprep.subr.mxu0 0.0
        %v229 = vand.u32 %v209, 4294901760
        %230 = vmatpush1.msra.mxu0 %v229
        %231 = vmatprep.subr.mxu0 0.0
        %v232 = vand.u32 %v210, 4294901760
        %233 = vmatpush1.msra.mxu0 %v232
        %234 = vmatprep.subr.mxu0 0.0
        %235 = vmatpush1.msra.mxu0 0.0
        %236 = vmatprep.subr.mxu0 0.0
        %237 = vmatpush1.msra.mxu0 0.0
        %238 = vmatprep.subr.mxu0 0.0
        %239 = vmatpush1.msra.mxu0 0.0
        %240 = vmatprep.subr.mxu0 0.0
        %241 = vmatpush1.msra.mxu0 0.0
        %242 = vmatprep.subr.mxu0 0.0
        %243 = vmatpush1.msra.mxu0 0.0
        %244 = vmatprep.subr.mxu0 0.0
        %245 = vmatpush1.msra.mxu0 0.0
        %246 = vmatprep.subr.mxu0 0.0
        %247 = vmatpush1.msra.mxu0 0.0
        %248 = vmatprep.subr.mxu0 0.0
        %249 = vmatpush1.msra.mxu0 0.0
        %250 = vmatprep.subr.mxu0 0.0
        %251 = vmatpush1.msra.mxu0 0.0
        %252 = vmatprep.subr.mxu0 0.0
        %253 = vmatpush1.msra.mxu0 0.0
        %254 = vmatprep.subr.mxu0 0.0
        %255 = vmatpush1.msra.mxu0 0.0
        %256 = vmatprep.subr.mxu0 0.0
        %257 = vmatpush1.msra.mxu0 0.0
        %258 = vmatprep.subr.mxu0 0.0
        %259 = vmatpush1.msra.mxu0 0.0
        %260 = vmatprep.subr.mxu0 0.0
        %261 = vmatpush1.msra.mxu0 0.0
        %262 = vmatprep.subr.mxu0 0.0
        %263 = vmatpush1.msra.mxu0 0.0
        %264 = vmatprep.subr.mxu0 0.0
        %265 = vmatpush1.msra.mxu0 0.0
        %266 = vmatprep.subr.mxu0 0.0
        %267 = vmatpush1.msra.mxu0 0.0
        %268 = vmatprep.subr.mxu0 0.0
        %269 = vmatpush1.msra.mxu0 0.0
        %270 = vmatprep.subr.mxu0 0.0
        %271 = vmatpush1.msra.mxu0 0.0
        %272 = vmatprep.subr.mxu0 0.0
        %273 = vmatpush1.msra.mxu0 0.0
        %274 = vmatprep.subr.mxu0 0.0
        %275 = vmatpush1.msra.mxu0 0.0
        %276 = vmatprep.subr.mxu0 0.0
        %277 = vmatpush1.msra.mxu0 0.0
        %278 = vmatprep.subr.mxu0 0.0
        %279 = vmatpush1.msra.mxu0 0.0
        %280 = vmatprep.subr.mxu0 0.0
        %281 = vmatpush1.msra.mxu0 0.0
        %282 = vmatprep.subr.mxu0 0.0
        %283 = vmatpush1.msra.mxu0 0.0
        %284 = vmatprep.subr.mxu0 0.0
        %285 = vmatpush1.msra.mxu0 0.0
        %286 = vmatprep.subr.mxu0 0.0
        %287 = vmatpush1.msra.mxu0 0.0
        %288 = vmatprep.subr.mxu0 0.0
        %289 = vmatpush1.msra.mxu0 0.0
        %290 = vmatprep.subr.mxu0 0.0
        %291 = vmatpush1.msra.mxu0 0.0
        %292 = vmatprep.subr.mxu0 0.0
        %293 = vmatpush1.msra.mxu0 0.0
        %294 = vmatprep.mubr.f32.mxu0 0.0
        %v295 = vand.u32 %v217, 4294901760
        %v296 = vsub.f32 %v217, %v295
        %v297 = vand.u32 %v296, 4294901760
        %v298 = vsub.f32 %v296, %v297
        %v299 = vand.u32 %v298, 4294901760
        %300 = vmatmul.mubr.f32.gmra.mrb[0].mxu0 %v299
        %v301 = vpop.f32.mrb[0].mxu0
        %v302 = vadd.f32 0.0, %v301
        %v303 = vpop.f32.mrb[0].mxu0
        %304 = vmatprep.mubr.f32.mxu0 0.0
        %v305 = vand.u32 %v220, 4294901760
        %v306 = vsub.f32 %v220, %v305
        %v307 = vand.u32 %v306, 4294901760
        %v308 = vsub.f32 %v306, %v307
        %v309 = vand.u32 %v308, 4294901760
        %310 = vmatmul.mubr.f32.gmra.mrb[0].mxu0 %v309
        %v311 = vpop.f32.mrb[0].mxu0
        %v312 = vadd.f32 0.0, %v311
        %v313 = vpop.f32.mrb[0].mxu0
        %314 = vmatprep.mubr.f32.mxu0 0.0
        %v315 = vand.u32 %v223, 4294901760
        %v316 = vsub.f32 %v223, %v315
        %v317 = vand.u32 %v316, 4294901760
        %v318 = vsub.f32 %v316, %v317
        %v319 = vand.u32 %v318, 4294901760
        %320 = vmatmul.mubr.f32.gmra.mrb[0].mxu0 %v319
        %v321 = vpop.f32.mrb[0].mxu0
        %v322 = vadd.f32 0.0, %v321
        %v323 = vpop.f32.mrb[0].mxu0
        %324 = vmatprep.mubr.f32.mxu0 0.0
        %v325 = vand.u32 %v226, 4294901760
        %v326 = vsub.f32 %v226, %v325
        %v327 = vand.u32 %v326, 4294901760
        %v328 = vsub.f32 %v326, %v327
        %v329 = vand.u32 %v328, 4294901760
        %330 = vmatmul.mubr.f32.gmra.mrb[0].mxu0 %v329
        %v331 = vpop.f32.mrb[0].mxu0
        %v332 = vadd.f32 0.0, %v331
        %v333 = vpop.f32.mrb[0].mxu0
        %334 = vdwg.mxu0
        %335 = vmatprep.subr.mxu0 0.0
        %v336 = vand.u32 %v209, 4294901760
        %v337 = vsub.f32 %v209, %v336
        %v338 = vand.u32 %v337, 4294901760
        %v339 = vsub.f32 %v337, %v338
        %v340 = vand.u32 %v339, 4294901760
        %341 = vmatpush1.msra.mxu0 %v340
        %342 = vmatprep.subr.mxu0 0.0
        %v343 = vand.u32 %v210, 4294901760
        %v344 = vsub.f32 %v210, %v343
        %v345 = vand.u32 %v344, 4294901760
        %v346 = vsub.f32 %v344, %v345
        %v347 = vand.u32 %v346, 4294901760
        %348 = vmatpush1.msra.mxu0 %v347
        %349 = vmatprep.subr.mxu0 0.0
        %350 = vmatpush1.msra.mxu0 0.0
        %351 = vmatprep.subr.mxu0 0.0
        %352 = vmatpush1.msra.mxu0 0.0
        %353 = vmatprep.subr.mxu0 0.0
        %354 = vmatpush1.msra.mxu0 0.0
        %355 = vmatprep.subr.mxu0 0.0
        %356 = vmatpush1.msra.mxu0 0.0
        %357 = vmatprep.subr.mxu0 0.0
        %358 = vmatpush1.msra.mxu0 0.0
        %359 = vmatprep.subr.mxu0 0.0
        %360 = vmatpush1.msra.mxu0 0.0
        %361 = vmatprep.subr.mxu0 0.0
        %362 = vmatpush1.msra.mxu0 0.0
        %363 = vmatprep.subr.mxu0 0.0
        %364 = vmatpush1.msra.mxu0 0.0
        %365 = vmatprep.subr.mxu0 0.0
        %366 = vmatpush1.msra.mxu0 0.0
        %367 = vmatprep.subr.mxu0 0.0
        %368 = vmatpush1.msra.mxu0 0.0
        %369 = vmatprep.subr.mxu0 0.0
        %370 = vmatpush1.msra.mxu0 0.0
        %371 = vmatprep.subr.mxu0 0.0
        %372 = vmatpush1.msra.mxu0 0.0
        %373 = vmatprep.subr.mxu0 0.0
        %374 = vmatpush1.msra.mxu0 0.0
        %375 = vmatprep.subr.mxu0 0.0
        %376 = vmatpush1.msra.mxu0 0.0
        %377 = vmatprep.subr.mxu0 0.0
        %378 = vmatpush1.msra.mxu0 0.0
        %379 = vmatprep.subr.mxu0 0.0
        %380 = vmatpush1.msra.mxu0 0.0
        %381 = vmatprep.subr.mxu0 0.0
        %382 = vmatpush1.msra.mxu0 0.0
        %383 = vmatprep.subr.mxu0 0.0
        %384 = vmatpush1.msra.mxu0 0.0
        %385 = vmatprep.subr.mxu0 0.0
        %386 = vmatpush1.msra.mxu0 0.0
        %387 = vmatprep.subr.mxu0 0.0
        %388 = vmatpush1.msra.mxu0 0.0
        %389 = vmatprep.subr.mxu0 0.0
        %390 = vmatpush1.msra.mxu0 0.0
        %391 = vmatprep.subr.mxu0 0.0
        %392 = vmatpush1.msra.mxu0 0.0
        %393 = vmatprep.subr.mxu0 0.0
        %394 = vmatpush1.msra.mxu0 0.0
        %395 = vmatprep.subr.mxu0 0.0
        %396 = vmatpush1.msra.mxu0 0.0
        %397 = vmatprep.subr.mxu0 0.0
        %398 = vmatpush1.msra.mxu0 0.0
        %399 = vmatprep.subr.mxu0 0.0
        %400 = vmatpush1.msra.mxu0 0.0
        %401 = vmatprep.subr.mxu0 0.0
        %402 = vmatpush1.msra.mxu0 0.0
        %403 = vmatprep.subr.mxu0 0.0
        %404 = vmatpush1.msra.mxu0 0.0
        %405 = vmatprep.subr.mxu0 0.0
        %406 = vmatpush1.msra.mxu0 0.0
        %407 = vmatprep.subr.mxu0 0.0
        %408 = vmatpush1.msra.mxu0 0.0
        %409 = vmatprep.mubr.f32.mxu0 0.0
        %v410 = vand.u32 %v217, 4294901760
        %411 = vmatmul.mubr.f32.gmra.mrb[0].mxu0 %v410
        %v412 = vpop.f32.mrb[0].mxu0
        %v413 = vadd.f32 %v302, %v412
        %v414 = vpop.f32.mrb[0].mxu0
        %415 = vmatprep.mubr.f32.mxu0 0.0
        %v416 = vand.u32 %v220, 4294901760
        %417 = vmatmul.mubr.f32.gmra.mrb[0].mxu0 %v416
        %v418 = vpop.f32.mrb[0].mxu0
        %v419 = vadd.f32 %v312, %v418
        %v420 = vpop.f32.mrb[0].mxu0
        %421 = vmatprep.mubr.f32.mxu0 0.0
        %v422 = vand.u32 %v223, 4294901760
        %423 = vmatmul.mubr.f32.gmra.mrb[0].mxu0 %v422
        %v424 = vpop.f32.mrb[0].mxu0
        %v425 = vadd.f32 %v322, %v424
        %v426 = vpop.f32.mrb[0].mxu0
        %427 = vmatprep.mubr.f32.mxu0 0.0
        %v428 = vand.u32 %v226, 4294901760
        %429 = vmatmul.mubr.f32.gmra.mrb[0].mxu0 %v428
        %v430 = vpop.f32.mrb[0].mxu0
        %v431 = vadd.f32 %v332, %v430
        %v432 = vpop.f32.mrb[0].mxu0
        %433 = vdwg.mxu0
        %434 = vmatprep.subr.mxu0 0.0
        %v435 = vand.u32 %v209, 4294901760
        %v436 = vsub.f32 %v209, %v435
        %437 = vmatpush1.msra.mxu0 %v436
        %438 = vmatprep.subr.mxu0 0.0
        %v439 = vand.u32 %v210, 4294901760
        %v440 = vsub.f32 %v210, %v439
        %441 = vmatpush1.msra.mxu0 %v440
        %442 = vmatprep.subr.mxu0 0.0
        %443 = vmatpush1.msra.mxu0 0.0
        %444 = vmatprep.subr.mxu0 0.0
        %445 = vmatpush1.msra.mxu0 0.0
        %446 = vmatprep.subr.mxu0 0.0
        %447 = vmatpush1.msra.mxu0 0.0
        %448 = vmatprep.subr.mxu0 0.0
        %449 = vmatpush1.msra.mxu0 0.0
        %450 = vmatprep.subr.mxu0 0.0
        %451 = vmatpush1.msra.mxu0 0.0
        %452 = vmatprep.subr.mxu0 0.0
        %453 = vmatpush1.msra.mxu0 0.0
        %454 = vmatprep.subr.mxu0 0.0
        %455 = vmatpush1.msra.mxu0 0.0
        %456 = vmatprep.subr.mxu0 0.0
        %457 = vmatpush1.msra.mxu0 0.0
        %458 = vmatprep.subr.mxu0 0.0
        %459 = vmatpush1.msra.mxu0 0.0
        %460 = vmatprep.subr.mxu0 0.0
        %461 = vmatpush1.msra.mxu0 0.0
        %462 = vmatprep.subr.mxu0 0.0
        %463 = vmatpush1.msra.mxu0 0.0
        %464 = vmatprep.subr.mxu0 0.0
        %465 = vmatpush1.msra.mxu0 0.0
        %466 = vmatprep.subr.mxu0 0.0
        %467 = vmatpush1.msra.mxu0 0.0
        %468 = vmatprep.subr.mxu0 0.0
        %469 = vmatpush1.msra.mxu0 0.0
        %470 = vmatprep.subr.mxu0 0.0
        %471 = vmatpush1.msra.mxu0 0.0
        %472 = vmatprep.subr.mxu0 0.0
        %473 = vmatpush1.msra.mxu0 0.0
        %474 = vmatprep.subr.mxu0 0.0
        %475 = vmatpush1.msra.mxu0 0.0
        %476 = vmatprep.subr.mxu0 0.0
        %477 = vmatpush1.msra.mxu0 0.0
        %478 = vmatprep.subr.mxu0 0.0
        %479 = vmatpush1.msra.mxu0 0.0
        %480 = vmatprep.subr.mxu0 0.0
        %481 = vmatpush1.msra.mxu0 0.0
        %482 = vmatprep.subr.mxu0 0.0
        %483 = vmatpush1.msra.mxu0 0.0
        %484 = vmatprep.subr.mxu0 0.0
        %485 = vmatpush1.msra.mxu0 0.0
        %486 = vmatprep.subr.mxu0 0.0
        %487 = vmatpush1.msra.mxu0 0.0
        %488 = vmatprep.subr.mxu0 0.0
        %489 = vmatpush1.msra.mxu0 0.0
        %490 = vmatprep.subr.mxu0 0.0
        %491 = vmatpush1.msra.mxu0 0.0
        %492 = vmatprep.subr.mxu0 0.0
        %493 = vmatpush1.msra.mxu0 0.0
        %494 = vmatprep.subr.mxu0 0.0
        %495 = vmatpush1.msra.mxu0 0.0
        %496 = vmatprep.subr.mxu0 0.0
        %497 = vmatpush1.msra.mxu0 0.0
        %498 = vmatprep.subr.mxu0 0.0
        %499 = vmatpush1.msra.mxu0 0.0
        %500 = vmatprep.subr.mxu0 0.0
        %501 = vmatpush1.msra.mxu0 0.0
        %502 = vmatprep.mubr.f32.mxu0 0.0
        %v503 = vand.u32 %v217, 4294901760
        %v504 = vsub.f32 %v217, %v503
        %505 = vmatmul.mubr.f32.gmra.mrb[0].mxu0 %v504
        %v506 = vpop.f32.mrb[0].mxu0
        %v507 = vadd.f32 %v413, %v506
        %v508 = vpop.f32.mrb[0].mxu0
        %509 = vmatprep.mubr.f32.mxu0 0.0
        %v510 = vand.u32 %v220, 4294901760
        %v511 = vsub.f32 %v220, %v510
        %512 = vmatmul.mubr.f32.gmra.mrb[0].mxu0 %v511
        %v513 = vpop.f32.mrb[0].mxu0
        %v514 = vadd.f32 %v419, %v513
        %v515 = vpop.f32.mrb[0].mxu0
        %516 = vmatprep.mubr.f32.mxu0 0.0
        %v517 = vand.u32 %v223, 4294901760
        %v518 = vsub.f32 %v223, %v517
        %519 = vmatmul.mubr.f32.gmra.mrb[0].mxu0 %v518
        %v520 = vpop.f32.mrb[0].mxu0
        %v521 = vadd.f32 %v425, %v520
        %v522 = vpop.f32.mrb[0].mxu0
        %523 = vmatprep.mubr.f32.mxu0 0.0
        %v524 = vand.u32 %v226, 4294901760
        %v525 = vsub.f32 %v226, %v524
        %526 = vmatmul.mubr.f32.gmra.mrb[0].mxu0 %v525
        %v527 = vpop.f32.mrb[0].mxu0
        %v528 = vadd.f32 %v431, %v527
        %v529 = vpop.f32.mrb[0].mxu0
        %530 = vdwg.mxu0
        %531 = vmatprep.subr.mxu0 0.0
        %v532 = vand.u32 %v209, 4294901760
        %533 = vmatpush1.msra.mxu0 %v532
        %534 = vmatprep.subr.mxu0 0.0
        %v535 = vand.u32 %v210, 4294901760
        %536 = vmatpush1.msra.mxu0 %v535
        %537 = vmatprep.subr.mxu0 0.0
        %538 = vmatpush1.msra.mxu0 0.0
        %539 = vmatprep.subr.mxu0 0.0
        %540 = vmatpush1.msra.mxu0 0.0
        %541 = vmatprep.subr.mxu0 0.0
        %542 = vmatpush1.msra.mxu0 0.0
        %543 = vmatprep.subr.mxu0 0.0
        %544 = vmatpush1.msra.mxu0 0.0
        %545 = vmatprep.subr.mxu0 0.0
        %546 = vmatpush1.msra.mxu0 0.0
        %547 = vmatprep.subr.mxu0 0.0
        %548 = vmatpush1.msra.mxu0 0.0
        %549 = vmatprep.subr.mxu0 0.0
        %550 = vmatpush1.msra.mxu0 0.0
        %551 = vmatprep.subr.mxu0 0.0
        %552 = vmatpush1.msra.mxu0 0.0
        %553 = vmatprep.subr.mxu0 0.0
        %554 = vmatpush1.msra.mxu0 0.0
        %555 = vmatprep.subr.mxu0 0.0
        %556 = vmatpush1.msra.mxu0 0.0
        %557 = vmatprep.subr.mxu0 0.0
        %558 = vmatpush1.msra.mxu0 0.0
        %559 = vmatprep.subr.mxu0 0.0
        %560 = vmatpush1.msra.mxu0 0.0
        %561 = vmatprep.subr.mxu0 0.0
        %562 = vmatpush1.msra.mxu0 0.0
        %563 = vmatprep.subr.mxu0 0.0
        %564 = vmatpush1.msra.mxu0 0.0
        %565 = vmatprep.subr.mxu0 0.0
        %566 = vmatpush1.msra.mxu0 0.0
        %567 = vmatprep.subr.mxu0 0.0
        %568 = vmatpush1.msra.mxu0 0.0
        %569 = vmatprep.subr.mxu0 0.0
        %570 = vmatpush1.msra.mxu0 0.0
        %571 = vmatprep.subr.mxu0 0.0
        %572 = vmatpush1.msra.mxu0 0.0
        %573 = vmatprep.subr.mxu0 0.0
        %574 = vmatpush1.msra.mxu0 0.0
        %575 = vmatprep.subr.mxu0 0.0
        %576 = vmatpush1.msra.mxu0 0.0
        %577 = vmatprep.subr.mxu0 0.0
        %578 = vmatpush1.msra.mxu0 0.0
        %579 = vmatprep.subr.mxu0 0.0
        %580 = vmatpush1.msra.mxu0 0.0
        %581 = vmatprep.subr.mxu0 0.0
        %582 = vmatpush1.msra.mxu0 0.0
        %583 = vmatprep.subr.mxu0 0.0
        %584 = vmatpush1.msra.mxu0 0.0
        %585 = vmatprep.subr.mxu0 0.0
        %586 = vmatpush1.msra.mxu0 0.0
        %587 = vmatprep.subr.mxu0 0.0
        %588 = vmatpush1.msra.mxu0 0.0
        %589 = vmatprep.subr.mxu0 0.0
        %590 = vmatpush1.msra.mxu0 0.0
        %591 = vmatprep.subr.mxu0 0.0
        %592 = vmatpush1.msra.mxu0 0.0
        %593 = vmatprep.subr.mxu0 0.0
        %594 = vmatpush1.msra.mxu0 0.0
        %595 = vmatprep.subr.mxu0 0.0
        %596 = vmatpush1.msra.mxu0 0.0
        %597 = vmatprep.mubr.f32.mxu0 0.0
        %v598 = vand.u32 %v217, 4294901760
        %v599 = vsub.f32 %v217, %v598
        %v600 = vand.u32 %v599, 4294901760
        %601 = vmatmul.mubr.f32.gmra.mrb[0].mxu0 %v600
        %v602 = vpop.f32.mrb[0].mxu0
        %v603 = vadd.f32 %v507, %v602
        %v604 = vpop.f32.mrb[0].mxu0
        %605 = vmatprep.mubr.f32.mxu0 0.0
        %v606 = vand.u32 %v220, 4294901760
        %v607 = vsub.f32 %v220, %v606
        %v608 = vand.u32 %v607, 4294901760
        %609 = vmatmul.mubr.f32.gmra.mrb[0].mxu0 %v608
        %v610 = vpop.f32.mrb[0].mxu0
        %v611 = vadd.f32 %v514, %v610
        %v612 = vpop.f32.mrb[0].mxu0
        %613 = vmatprep.mubr.f32.mxu0 0.0
        %v614 = vand.u32 %v223, 4294901760
        %v615 = vsub.f32 %v223, %v614
        %v616 = vand.u32 %v615, 4294901760
        %617 = vmatmul.mubr.f32.gmra.mrb[0].mxu0 %v616
        %v618 = vpop.f32.mrb[0].mxu0
        %v619 = vadd.f32 %v521, %v618
        %v620 = vpop.f32.mrb[0].mxu0
        %621 = vmatprep.mubr.f32.mxu0 0.0
        %v622 = vand.u32 %v226, 4294901760
        %v623 = vsub.f32 %v226, %v622
        %v624 = vand.u32 %v623, 4294901760
        %625 = vmatmul.mubr.f32.gmra.mrb[0].mxu0 %v624
        %v626 = vpop.f32.mrb[0].mxu0
        %v627 = vadd.f32 %v528, %v626
        %v628 = vpop.f32.mrb[0].mxu0
        %629 = vdwg.mxu0
        %630 = vmatprep.subr.mxu0 0.0
        %v631 = vand.u32 %v209, 4294901760
        %v632 = vsub.f32 %v209, %v631
        %v633 = vand.u32 %v632, 4294901760
        %634 = vmatpush1.msra.mxu0 %v633
        %635 = vmatprep.subr.mxu0 0.0
        %v636 = vand.u32 %v210, 4294901760
        %v637 = vsub.f32 %v210, %v636
        %v638 = vand.u32 %v637, 4294901760
        %639 = vmatpush1.msra.mxu0 %v638
        %640 = vmatprep.subr.mxu0 0.0
        %641 = vmatpush1.msra.mxu0 0.0
        %642 = vmatprep.subr.mxu0 0.0
        %643 = vmatpush1.msra.mxu0 0.0
        %644 = vmatprep.subr.mxu0 0.0
        %645 = vmatpush1.msra.mxu0 0.0
        %646 = vmatprep.subr.mxu0 0.0
        %647 = vmatpush1.msra.mxu0 0.0
        %648 = vmatprep.subr.mxu0 0.0
        %649 = vmatpush1.msra.mxu0 0.0
        %650 = vmatprep.subr.mxu0 0.0
        %651 = vmatpush1.msra.mxu0 0.0
        %652 = vmatprep.subr.mxu0 0.0
        %653 = vmatpush1.msra.mxu0 0.0
        %654 = vmatprep.subr.mxu0 0.0
        %655 = vmatpush1.msra.mxu0 0.0
        %656 = vmatprep.subr.mxu0 0.0
        %657 = vmatpush1.msra.mxu0 0.0
        %658 = vmatprep.subr.mxu0 0.0
        %659 = vmatpush1.msra.mxu0 0.0
        %660 = vmatprep.subr.mxu0 0.0
        %661 = vmatpush1.msra.mxu0 0.0
        %662 = vmatprep.subr.mxu0 0.0
        %663 = vmatpush1.msra.mxu0 0.0
        %664 = vmatprep.subr.mxu0 0.0
        %665 = vmatpush1.msra.mxu0 0.0
        %666 = vmatprep.subr.mxu0 0.0
        %667 = vmatpush1.msra.mxu0 0.0
        %668 = vmatprep.subr.mxu0 0.0
        %669 = vmatpush1.msra.mxu0 0.0
        %670 = vmatprep.subr.mxu0 0.0
        %671 = vmatpush1.msra.mxu0 0.0
        %672 = vmatprep.subr.mxu0 0.0
        %673 = vmatpush1.msra.mxu0 0.0
        %674 = vmatprep.subr.mxu0 0.0
        %675 = vmatpush1.msra.mxu0 0.0
        %676 = vmatprep.subr.mxu0 0.0
        %677 = vmatpush1.msra.mxu0 0.0
        %678 = vmatprep.subr.mxu0 0.0
        %679 = vmatpush1.msra.mxu0 0.0
        %680 = vmatprep.subr.mxu0 0.0
        %681 = vmatpush1.msra.mxu0 0.0
        %682 = vmatprep.subr.mxu0 0.0
        %683 = vmatpush1.msra.mxu0 0.0
        %684 = vmatprep.subr.mxu0 0.0
        %685 = vmatpush1.msra.mxu0 0.0
        %686 = vmatprep.subr.mxu0 0.0
        %687 = vmatpush1.msra.mxu0 0.0
        %688 = vmatprep.subr.mxu0 0.0
        %689 = vmatpush1.msra.mxu0 0.0
        %690 = vmatprep.subr.mxu0 0.0
        %691 = vmatpush1.msra.mxu0 0.0
        %692 = vmatprep.subr.mxu0 0.0
        %693 = vmatpush1.msra.mxu0 0.0
        %694 = vmatprep.subr.mxu0 0.0
        %695 = vmatpush1.msra.mxu0 0.0
        %696 = vmatprep.subr.mxu0 0.0
        %697 = vmatpush1.msra.mxu0 0.0
        %698 = vmatprep.subr.mxu0 0.0
        %699 = vmatpush1.msra.mxu0 0.0
        %700 = vmatprep.mubr.f32.mxu0 0.0
        %v701 = vand.u32 %v217, 4294901760
        %702 = vmatmul.mubr.f32.gmra.mrb[0].mxu0 %v701
        %v703 = vpop.f32.mrb[0].mxu0
        %v704 = vadd.f32 %v603, %v703
        %v705 = vpop.f32.mrb[0].mxu0
        %706 = vmatprep.mubr.f32.mxu0 0.0
        %v707 = vand.u32 %v220, 4294901760
        %708 = vmatmul.mubr.f32.gmra.mrb[0].mxu0 %v707
        %v709 = vpop.f32.mrb[0].mxu0
        %v710 = vadd.f32 %v611, %v709
        %v711 = vpop.f32.mrb[0].mxu0
        %712 = vmatprep.mubr.f32.mxu0 0.0
        %v713 = vand.u32 %v223, 4294901760
        %714 = vmatmul.mubr.f32.gmra.mrb[0].mxu0 %v713
        %v715 = vpop.f32.mrb[0].mxu0
        %v716 = vadd.f32 %v619, %v715
        %v717 = vpop.f32.mrb[0].mxu0
        %718 = vmatprep.mubr.f32.mxu0 0.0
        %v719 = vand.u32 %v226, 4294901760
        %720 = vmatmul.mubr.f32.gmra.mrb[0].mxu0 %v719
        %v721 = vpop.f32.mrb[0].mxu0
        %v722 = vadd.f32 %v627, %v721
        %v723 = vpop.f32.mrb[0].mxu0
        %724 = vdwg.mxu0
        %725 = vmatprep.subr.mxu0 0.0
        %v726 = vand.u32 %v209, 4294901760
        %727 = vmatpush1.msra.mxu0 %v726
        %728 = vmatprep.subr.mxu0 0.0
        %v729 = vand.u32 %v210, 4294901760
        %730 = vmatpush1.msra.mxu0 %v729
        %731 = vmatprep.subr.mxu0 0.0
        %732 = vmatpush1.msra.mxu0 0.0
        %733 = vmatprep.subr.mxu0 0.0
        %734 = vmatpush1.msra.mxu0 0.0
        %735 = vmatprep.subr.mxu0 0.0
        %736 = vmatpush1.msra.mxu0 0.0
        %737 = vmatprep.subr.mxu0 0.0
        %738 = vmatpush1.msra.mxu0 0.0
        %739 = vmatprep.subr.mxu0 0.0
        %740 = vmatpush1.msra.mxu0 0.0
        %741 = vmatprep.subr.mxu0 0.0
        %742 = vmatpush1.msra.mxu0 0.0
        %743 = vmatprep.subr.mxu0 0.0
        %744 = vmatpush1.msra.mxu0 0.0
        %745 = vmatprep.subr.mxu0 0.0
        %746 = vmatpush1.msra.mxu0 0.0
        %747 = vmatprep.subr.mxu0 0.0
        %748 = vmatpush1.msra.mxu0 0.0
        %749 = vmatprep.subr.mxu0 0.0
        %750 = vmatpush1.msra.mxu0 0.0
        %751 = vmatprep.subr.mxu0 0.0
        %752 = vmatpush1.msra.mxu0 0.0
        %753 = vmatprep.subr.mxu0 0.0
        %754 = vmatpush1.msra.mxu0 0.0
        %755 = vmatprep.subr.mxu0 0.0
        %756 = vmatpush1.msra.mxu0 0.0
        %757 = vmatprep.subr.mxu0 0.0
        %758 = vmatpush1.msra.mxu0 0.0
        %759 = vmatprep.subr.mxu0 0.0
        %760 = vmatpush1.msra.mxu0 0.0
        %761 = vmatprep.subr.mxu0 0.0
        %762 = vmatpush1.msra.mxu0 0.0
        %763 = vmatprep.subr.mxu0 0.0
        %764 = vmatpush1.msra.mxu0 0.0
        %765 = vmatprep.subr.mxu0 0.0
        %766 = vmatpush1.msra.mxu0 0.0
        %767 = vmatprep.subr.mxu0 0.0
        %768 = vmatpush1.msra.mxu0 0.0
        %769 = vmatprep.subr.mxu0 0.0
        %770 = vmatpush1.msra.mxu0 0.0
        %771 = vmatprep.subr.mxu0 0.0
        %772 = vmatpush1.msra.mxu0 0.0
        %773 = vmatprep.subr.mxu0 0.0
        %774 = vmatpush1.msra.mxu0 0.0
        %775 = vmatprep.subr.mxu0 0.0
        %776 = vmatpush1.msra.mxu0 0.0
        %777 = vmatprep.subr.mxu0 0.0
        %778 = vmatpush1.msra.mxu0 0.0
        %779 = vmatprep.subr.mxu0 0.0
        %780 = vmatpush1.msra.mxu0 0.0
        %781 = vmatprep.subr.mxu0 0.0
        %782 = vmatpush1.msra.mxu0 0.0
        %783 = vmatprep.subr.mxu0 0.0
        %784 = vmatpush1.msra.mxu0 0.0
        %785 = vmatprep.subr.mxu0 0.0
        %786 = vmatpush1.msra.mxu0 0.0
        %787 = vmatprep.subr.mxu0 0.0
        %788 = vmatpush1.msra.mxu0 0.0
        %789 = vmatprep.subr.mxu0 0.0
        %790 = vmatpush1.msra.mxu0 0.0
        %791 = vmatprep.mubr.f32.mxu0 0.0
        %v792 = vand.u32 %v217, 4294901760
        %793 = vmatmul.mubr.f32.gmra.mrb[0].mxu0 %v792
        %v794 = vpop.f32.mrb[0].mxu0
        %v795 = vadd.f32 %v704, %v794
        %v796 = vpop.f32.mrb[0].mxu0
        %797 = vmatprep.mubr.f32.mxu0 0.0
        %v798 = vand.u32 %v220, 4294901760
        %799 = vmatmul.mubr.f32.gmra.mrb[0].mxu0 %v798
        %v800 = vpop.f32.mrb[0].mxu0
        %v801 = vadd.f32 %v710, %v800
        %v802 = vpop.f32.mrb[0].mxu0
        %803 = vmatprep.mubr.f32.mxu0 0.0
        %v804 = vand.u32 %v223, 4294901760
        %805 = vmatmul.mubr.f32.gmra.mrb[0].mxu0 %v804
        %v806 = vpop.f32.mrb[0].mxu0
        %v807 = vadd.f32 %v716, %v806
        %v808 = vpop.f32.mrb[0].mxu0
        %809 = vmatprep.mubr.f32.mxu0 0.0
        %v810 = vand.u32 %v226, 4294901760
        %811 = vmatmul.mubr.f32.gmra.mrb[0].mxu0 %v810
        %v812 = vpop.f32.mrb[0].mxu0
        %v813 = vadd.f32 %v722, %v812
        %v814 = vpop.f32.mrb[0].mxu0
        %815 = vdwg.mxu0
        %vm816 = vcmask 64512
        %817 = vst.msk [vmem:[%s206] sm:$0xff] %vm816, %v795
        %818 = vst.msk [vmem:[%s206 + $0x20] sm:$0xff] %vm816, %v801
        %819 = vst.msk [vmem:[%s206 + $0x40] sm:$0xff] %vm816, %v807
        %820 = vst.msk [vmem:[%s206 + $0x60] sm:$0xff] %vm816, %v813
        %825 = vrot.lane.b32.xlu0 %v795, 120
        %v826 = vpop.permute.xlu0 %825
        %827 = vrot.lane.b32.xlu0 %v801, 120
        %v828 = vpop.permute.xlu0 %827
        %829 = vrot.lane.b32.xlu0 %v807, 120
        %v830 = vpop.permute.xlu0 %829
        %831 = vrot.lane.b32.xlu0 %v813, 120
        %v832 = vpop.permute.xlu0 %831
        %s837 = scalar_lea.vmem %s206, 8 [#allocation7]
        %838 = vst.msk [vmem:[%s837] sm:$0xff] %vm816, %v826
        %839 = vst.msk [vmem:[%s837 + $0x20] sm:$0xff] %vm816, %v828
        %840 = vst.msk [vmem:[%s837 + $0x40] sm:$0xff] %vm816, %v830
        %841 = vst.msk [vmem:[%s837 + $0x60] sm:$0xff] %vm816, %v832
        %842 = vrot.lane.b32.xlu0 %v211, 112
        %v843 = vpop.permute.xlu0 %842
        %844 = vrot.lane.b32.xlu0 %v212, 112
        %v845 = vpop.permute.xlu0 %844
        %846 = vrot.lane.b32.xlu0 %v213, 112
        %v847 = vpop.permute.xlu0 %846
        %848 = vrot.lane.b32.xlu0 %v214, 112
        %v849 = vpop.permute.xlu0 %848
        %v850 = vsel %vm215, %v843, 0
        %v852 = vsel %vm215, %v845, 0
        %v854 = vsel %vm215, %v847, 0
        %v856 = vsel %vm215, %v849, 0
        %858 = vmatprep.subr.mxu0 0.0
        %v859 = vand.u32 %v209, 4294901760
        %860 = vmatpush1.msra.mxu0 %v859
        %861 = vmatprep.subr.mxu0 0.0
        %v862 = vand.u32 %v210, 4294901760
        %863 = vmatpush1.msra.mxu0 %v862
        %864 = vmatprep.subr.mxu0 0.0
        %865 = vmatpush1.msra.mxu0 0.0
        %866 = vmatprep.subr.mxu0 0.0
        %867 = vmatpush1.msra.mxu0 0.0
        %868 = vmatprep.subr.mxu0 0.0
        %869 = vmatpush1.msra.mxu0 0.0
        %870 = vmatprep.subr.mxu0 0.0
        %871 = vmatpush1.msra.mxu0 0.0
        %872 = vmatprep.subr.mxu0 0.0
        %873 = vmatpush1.msra.mxu0 0.0
        %874 = vmatprep.subr.mxu0 0.0
        %875 = vmatpush1.msra.mxu0 0.0
        %876 = vmatprep.subr.mxu0 0.0
        %877 = vmatpush1.msra.mxu0 0.0
        %878 = vmatprep.subr.mxu0 0.0
        %879 = vmatpush1.msra.mxu0 0.0
        %880 = vmatprep.subr.mxu0 0.0
        %881 = vmatpush1.msra.mxu0 0.0
        %882 = vmatprep.subr.mxu0 0.0
        %883 = vmatpush1.msra.mxu0 0.0
        %884 = vmatprep.subr.mxu0 0.0
        %885 = vmatpush1.msra.mxu0 0.0
        %886 = vmatprep.subr.mxu0 0.0
        %887 = vmatpush1.msra.mxu0 0.0
        %888 = vmatprep.subr.mxu0 0.0
        %889 = vmatpush1.msra.mxu0 0.0
        %890 = vmatprep.subr.mxu0 0.0
        %891 = vmatpush1.msra.mxu0 0.0
        %892 = vmatprep.subr.mxu0 0.0
        %893 = vmatpush1.msra.mxu0 0.0
        %894 = vmatprep.subr.mxu0 0.0
        %895 = vmatpush1.msra.mxu0 0.0
        %896 = vmatprep.subr.mxu0 0.0
        %897 = vmatpush1.msra.mxu0 0.0
        %898 = vmatprep.subr.mxu0 0.0
        %899 = vmatpush1.msra.mxu0 0.0
        %900 = vmatprep.subr.mxu0 0.0
        %901 = vmatpush1.msra.mxu0 0.0
        %902 = vmatprep.subr.mxu0 0.0
        %903 = vmatpush1.msra.mxu0 0.0
        %904 = vmatprep.subr.mxu0 0.0
        %905 = vmatpush1.msra.mxu0 0.0
        %906 = vmatprep.subr.mxu0 0.0
        %907 = vmatpush1.msra.mxu0 0.0
        %908 = vmatprep.subr.mxu0 0.0
        %909 = vmatpush1.msra.mxu0 0.0
        %910 = vmatprep.subr.mxu0 0.0
        %911 = vmatpush1.msra.mxu0 0.0
        %912 = vmatprep.subr.mxu0 0.0
        %913 = vmatpush1.msra.mxu0 0.0
        %914 = vmatprep.subr.mxu0 0.0
        %915 = vmatpush1.msra.mxu0 0.0
        %916 = vmatprep.subr.mxu0 0.0
        %917 = vmatpush1.msra.mxu0 0.0
        %918 = vmatprep.subr.mxu0 0.0
        %919 = vmatpush1.msra.mxu0 0.0
        %920 = vmatprep.subr.mxu0 0.0
        %921 = vmatpush1.msra.mxu0 0.0
        %922 = vmatprep.subr.mxu0 0.0
        %923 = vmatpush1.msra.mxu0 0.0
        %924 = vmatprep.mubr.f32.mxu0 0.0
        %v925 = vand.u32 %v850, 4294901760
        %v926 = vsub.f32 %v850, %v925
        %v927 = vand.u32 %v926, 4294901760
        %v928 = vsub.f32 %v926, %v927
        %v929 = vand.u32 %v928, 4294901760
        %930 = vmatmul.mubr.f32.gmra.mrb[0].mxu0 %v929
        %v931 = vpop.f32.mrb[0].mxu0
        %v932 = vadd.f32 0.0, %v931
        %v933 = vpop.f32.mrb[0].mxu0
        %934 = vmatprep.mubr.f32.mxu0 0.0
        %v935 = vand.u32 %v852, 4294901760
        %v936 = vsub.f32 %v852, %v935
        %v937 = vand.u32 %v936, 4294901760
        %v938 = vsub.f32 %v936, %v937
        %v939 = vand.u32 %v938, 4294901760
        %940 = vmatmul.mubr.f32.gmra.mrb[0].mxu0 %v939
        %v941 = vpop.f32.mrb[0].mxu0
        %v942 = vadd.f32 0.0, %v941
        %v943 = vpop.f32.mrb[0].mxu0
        %944 = vmatprep.mubr.f32.mxu0 0.0
        %v945 = vand.u32 %v854, 4294901760
        %v946 = vsub.f32 %v854, %v945
        %v947 = vand.u32 %v946, 4294901760
        %v948 = vsub.f32 %v946, %v947
        %v949 = vand.u32 %v948, 4294901760
        %950 = vmatmul.mubr.f32.gmra.mrb[0].mxu0 %v949
        %v951 = vpop.f32.mrb[0].mxu0
        %v952 = vadd.f32 0.0, %v951
        %v953 = vpop.f32.mrb[0].mxu0
        %954 = vmatprep.mubr.f32.mxu0 0.0
        %v955 = vand.u32 %v856, 4294901760
        %v956 = vsub.f32 %v856, %v955
        %v957 = vand.u32 %v956, 4294901760
        %v958 = vsub.f32 %v956, %v957
        %v959 = vand.u32 %v958, 4294901760
        %960 = vmatmul.mubr.f32.gmra.mrb[0].mxu0 %v959
        %v961 = vpop.f32.mrb[0].mxu0
        %v962 = vadd.f32 0.0, %v961
        %v963 = vpop.f32.mrb[0].mxu0
        %964 = vdwg.mxu0
        %965 = vmatprep.subr.mxu0 0.0
        %v966 = vand.u32 %v209, 4294901760
        %v967 = vsub.f32 %v209, %v966
        %v968 = vand.u32 %v967, 4294901760
        %v969 = vsub.f32 %v967, %v968
        %v970 = vand.u32 %v969, 4294901760
        %971 = vmatpush1.msra.mxu0 %v970
        %972 = vmatprep.subr.mxu0 0.0
        %v973 = vand.u32 %v210, 4294901760
        %v974 = vsub.f32 %v210, %v973
        %v975 = vand.u32 %v974, 4294901760
        %v976 = vsub.f32 %v974, %v975
        %v977 = vand.u32 %v976, 4294901760
        %978 = vmatpush1.msra.mxu0 %v977
        %979 = vmatprep.subr.mxu0 0.0
        %980 = vmatpush1.msra.mxu0 0.0
        %981 = vmatprep.subr.mxu0 0.0
        %982 = vmatpush1.msra.mxu0 0.0
        %983 = vmatprep.subr.mxu0 0.0
        %984 = vmatpush1.msra.mxu0 0.0
        %985 = vmatprep.subr.mxu0 0.0
        %986 = vmatpush1.msra.mxu0 0.0
        %987 = vmatprep.subr.mxu0 0.0
        %988 = vmatpush1.msra.mxu0 0.0
        %989 = vmatprep.subr.mxu0 0.0
        %990 = vmatpush1.msra.mxu0 0.0
        %991 = vmatprep.subr.mxu0 0.0
        %992 = vmatpush1.msra.mxu0 0.0
        %993 = vmatprep.subr.mxu0 0.0
        %994 = vmatpush1.msra.mxu0 0.0
        %995 = vmatprep.subr.mxu0 0.0
        %996 = vmatpush1.msra.mxu0 0.0
        %997 = vmatprep.subr.mxu0 0.0
        %998 = vmatpush1.msra.mxu0 0.0
        %999 = vmatprep.subr.mxu0 0.0
        %1000 = vmatpush1.msra.mxu0 0.0
        %1001 = vmatprep.subr.mxu0 0.0
        %1002 = vmatpush1.msra.mxu0 0.0
        %1003 = vmatprep.subr.mxu0 0.0
        %1004 = vmatpush1.msra.mxu0 0.0
        %1005 = vmatprep.subr.mxu0 0.0
        %1006 = vmatpush1.msra.mxu0 0.0
        %1007 = vmatprep.subr.mxu0 0.0
        %1008 = vmatpush1.msra.mxu0 0.0
        %1009 = vmatprep.subr.mxu0 0.0
        %1010 = vmatpush1.msra.mxu0 0.0
        %1011 = vmatprep.subr.mxu0 0.0
        %1012 = vmatpush1.msra.mxu0 0.0
        %1013 = vmatprep.subr.mxu0 0.0
        %1014 = vmatpush1.msra.mxu0 0.0
        %1015 = vmatprep.subr.mxu0 0.0
        %1016 = vmatpush1.msra.mxu0 0.0
        %1017 = vmatprep.subr.mxu0 0.0
        %1018 = vmatpush1.msra.mxu0 0.0
        %1019 = vmatprep.subr.mxu0 0.0
        %1020 = vmatpush1.msra.mxu0 0.0
        %1021 = vmatprep.subr.mxu0 0.0
        %1022 = vmatpush1.msra.mxu0 0.0
        %1023 = vmatprep.subr.mxu0 0.0
        %1024 = vmatpush1.msra.mxu0 0.0
        %1025 = vmatprep.subr.mxu0 0.0
        %1026 = vmatpush1.msra.mxu0 0.0
        %1027 = vmatprep.subr.mxu0 0.0
        %1028 = vmatpush1.msra.mxu0 0.0
        %1029 = vmatprep.subr.mxu0 0.0
        %1030 = vmatpush1.msra.mxu0 0.0
        %1031 = vmatprep.subr.mxu0 0.0
        %1032 = vmatpush1.msra.mxu0 0.0
        %1033 = vmatprep.subr.mxu0 0.0
        %1034 = vmatpush1.msra.mxu0 0.0
        %1035 = vmatprep.subr.mxu0 0.0
        %1036 = vmatpush1.msra.mxu0 0.0
        %1037 = vmatprep.subr.mxu0 0.0
        %1038 = vmatpush1.msra.mxu0 0.0
        %1039 = vmatprep.mubr.f32.mxu0 0.0
        %v1040 = vand.u32 %v850, 4294901760
        %1041 = vmatmul.mubr.f32.gmra.mrb[0].mxu0 %v1040
        %v1042 = vpop.f32.mrb[0].mxu0
        %v1043 = vadd.f32 %v932, %v1042
        %v1044 = vpop.f32.mrb[0].mxu0
        %1045 = vmatprep.mubr.f32.mxu0 0.0
        %v1046 = vand.u32 %v852, 4294901760
        %1047 = vmatmul.mubr.f32.gmra.mrb[0].mxu0 %v1046
        %v1048 = vpop.f32.mrb[0].mxu0
        %v1049 = vadd.f32 %v942, %v1048
        %v1050 = vpop.f32.mrb[0].mxu0
        %1051 = vmatprep.mubr.f32.mxu0 0.0
        %v1052 = vand.u32 %v854, 4294901760
        %1053 = vmatmul.mubr.f32.gmra.mrb[0].mxu0 %v1052
        %v1054 = vpop.f32.mrb[0].mxu0
        %v1055 = vadd.f32 %v952, %v1054
        %v1056 = vpop.f32.mrb[0].mxu0
        %1057 = vmatprep.mubr.f32.mxu0 0.0
        %v1058 = vand.u32 %v856, 4294901760
        %1059 = vmatmul.mubr.f32.gmra.mrb[0].mxu0 %v1058
        %v1060 = vpop.f32.mrb[0].mxu0
        %v1061 = vadd.f32 %v962, %v1060
        %v1062 = vpop.f32.mrb[0].mxu0
        %1063 = vdwg.mxu0
        %1064 = vmatprep.subr.mxu0 0.0
        %v1065 = vand.u32 %v209, 4294901760
        %v1066 = vsub.f32 %v209, %v1065
        %1067 = vmatpush1.msra.mxu0 %v1066
        %1068 = vmatprep.subr.mxu0 0.0
        %v1069 = vand.u32 %v210, 4294901760
        %v1070 = vsub.f32 %v210, %v1069
        %1071 = vmatpush1.msra.mxu0 %v1070
        %1072 = vmatprep.subr.mxu0 0.0
        %1073 = vmatpush1.msra.mxu0 0.0
        %1074 = vmatprep.subr.mxu0 0.0
        %1075 = vmatpush1.msra.mxu0 0.0
        %1076 = vmatprep.subr.mxu0 0.0
        %1077 = vmatpush1.msra.mxu0 0.0
        %1078 = vmatprep.subr.mxu0 0.0
        %1079 = vmatpush1.msra.mxu0 0.0
        %1080 = vmatprep.subr.mxu0 0.0
        %1081 = vmatpush1.msra.mxu0 0.0
        %1082 = vmatprep.subr.mxu0 0.0
        %1083 = vmatpush1.msra.mxu0 0.0
        %1084 = vmatprep.subr.mxu0 0.0
        %1085 = vmatpush1.msra.mxu0 0.0
        %1086 = vmatprep.subr.mxu0 0.0
        %1087 = vmatpush1.msra.mxu0 0.0
        %1088 = vmatprep.subr.mxu0 0.0
        %1089 = vmatpush1.msra.mxu0 0.0
        %1090 = vmatprep.subr.mxu0 0.0
        %1091 = vmatpush1.msra.mxu0 0.0
        %1092 = vmatprep.subr.mxu0 0.0
        %1093 = vmatpush1.msra.mxu0 0.0
        %1094 = vmatprep.subr.mxu0 0.0
        %1095 = vmatpush1.msra.mxu0 0.0
        %1096 = vmatprep.subr.mxu0 0.0
        %1097 = vmatpush1.msra.mxu0 0.0
        %1098 = vmatprep.subr.mxu0 0.0
        %1099 = vmatpush1.msra.mxu0 0.0
        %1100 = vmatprep.subr.mxu0 0.0
        %1101 = vmatpush1.msra.mxu0 0.0
        %1102 = vmatprep.subr.mxu0 0.0
        %1103 = vmatpush1.msra.mxu0 0.0
        %1104 = vmatprep.subr.mxu0 0.0
        %1105 = vmatpush1.msra.mxu0 0.0
        %1106 = vmatprep.subr.mxu0 0.0
        %1107 = vmatpush1.msra.mxu0 0.0
        %1108 = vmatprep.subr.mxu0 0.0
        %1109 = vmatpush1.msra.mxu0 0.0
        %1110 = vmatprep.subr.mxu0 0.0
        %1111 = vmatpush1.msra.mxu0 0.0
        %1112 = vmatprep.subr.mxu0 0.0
        %1113 = vmatpush1.msra.mxu0 0.0
        %1114 = vmatprep.subr.mxu0 0.0
        %1115 = vmatpush1.msra.mxu0 0.0
        %1116 = vmatprep.subr.mxu0 0.0
        %1117 = vmatpush1.msra.mxu0 0.0
        %1118 = vmatprep.subr.mxu0 0.0
        %1119 = vmatpush1.msra.mxu0 0.0
        %1120 = vmatprep.subr.mxu0 0.0
        %1121 = vmatpush1.msra.mxu0 0.0
        %1122 = vmatprep.subr.mxu0 0.0
        %1123 = vmatpush1.msra.mxu0 0.0
        %1124 = vmatprep.subr.mxu0 0.0
        %1125 = vmatpush1.msra.mxu0 0.0
        %1126 = vmatprep.subr.mxu0 0.0
        %1127 = vmatpush1.msra.mxu0 0.0
        %1128 = vmatprep.subr.mxu0 0.0
        %1129 = vmatpush1.msra.mxu0 0.0
        %1130 = vmatprep.subr.mxu0 0.0
        %1131 = vmatpush1.msra.mxu0 0.0
        %1132 = vmatprep.mubr.f32.mxu0 0.0
        %v1133 = vand.u32 %v850, 4294901760
        %v1134 = vsub.f32 %v850, %v1133
        %1135 = vmatmul.mubr.f32.gmra.mrb[0].mxu0 %v1134
        %v1136 = vpop.f32.mrb[0].mxu0
        %v1137 = vadd.f32 %v1043, %v1136
        %v1138 = vpop.f32.mrb[0].mxu0
        %1139 = vmatprep.mubr.f32.mxu0 0.0
        %v1140 = vand.u32 %v852, 4294901760
        %v1141 = vsub.f32 %v852, %v1140
        %1142 = vmatmul.mubr.f32.gmra.mrb[0].mxu0 %v1141
        %v1143 = vpop.f32.mrb[0].mxu0
        %v1144 = vadd.f32 %v1049, %v1143
        %v1145 = vpop.f32.mrb[0].mxu0
        %1146 = vmatprep.mubr.f32.mxu0 0.0
        %v1147 = vand.u32 %v854, 4294901760
        %v1148 = vsub.f32 %v854, %v1147
        %1149 = vmatmul.mubr.f32.gmra.mrb[0].mxu0 %v1148
        %v1150 = vpop.f32.mrb[0].mxu0
        %v1151 = vadd.f32 %v1055, %v1150
        %v1152 = vpop.f32.mrb[0].mxu0
        %1153 = vmatprep.mubr.f32.mxu0 0.0
        %v1154 = vand.u32 %v856, 4294901760
        %v1155 = vsub.f32 %v856, %v1154
        %1156 = vmatmul.mubr.f32.gmra.mrb[0].mxu0 %v1155
        %v1157 = vpop.f32.mrb[0].mxu0
        %v1158 = vadd.f32 %v1061, %v1157
        %v1159 = vpop.f32.mrb[0].mxu0
        %1160 = vdwg.mxu0
        %1161 = vmatprep.subr.mxu0 0.0
        %v1162 = vand.u32 %v209, 4294901760
        %1163 = vmatpush1.msra.mxu0 %v1162
        %1164 = vmatprep.subr.mxu0 0.0
        %v1165 = vand.u32 %v210, 4294901760
        %1166 = vmatpush1.msra.mxu0 %v1165
        %1167 = vmatprep.subr.mxu0 0.0
        %1168 = vmatpush1.msra.mxu0 0.0
        %1169 = vmatprep.subr.mxu0 0.0
        %1170 = vmatpush1.msra.mxu0 0.0
        %1171 = vmatprep.subr.mxu0 0.0
        %1172 = vmatpush1.msra.mxu0 0.0
        %1173 = vmatprep.subr.mxu0 0.0
        %1174 = vmatpush1.msra.mxu0 0.0
        %1175 = vmatprep.subr.mxu0 0.0
        %1176 = vmatpush1.msra.mxu0 0.0
        %1177 = vmatprep.subr.mxu0 0.0
        %1178 = vmatpush1.msra.mxu0 0.0
        %1179 = vmatprep.subr.mxu0 0.0
        %1180 = vmatpush1.msra.mxu0 0.0
        %1181 = vmatprep.subr.mxu0 0.0
        %1182 = vmatpush1.msra.mxu0 0.0
        %1183 = vmatprep.subr.mxu0 0.0
        %1184 = vmatpush1.msra.mxu0 0.0
        %1185 = vmatprep.subr.mxu0 0.0
        %1186 = vmatpush1.msra.mxu0 0.0
        %1187 = vmatprep.subr.mxu0 0.0
        %1188 = vmatpush1.msra.mxu0 0.0
        %1189 = vmatprep.subr.mxu0 0.0
        %1190 = vmatpush1.msra.mxu0 0.0
        %1191 = vmatprep.subr.mxu0 0.0
        %1192 = vmatpush1.msra.mxu0 0.0
        %1193 = vmatprep.subr.mxu0 0.0
        %1194 = vmatpush1.msra.mxu0 0.0
        %1195 = vmatprep.subr.mxu0 0.0
        %1196 = vmatpush1.msra.mxu0 0.0
        %1197 = vmatprep.subr.mxu0 0.0
        %1198 = vmatpush1.msra.mxu0 0.0
        %1199 = vmatprep.subr.mxu0 0.0
        %1200 = vmatpush1.msra.mxu0 0.0
        %1201 = vmatprep.subr.mxu0 0.0
        %1202 = vmatpush1.msra.mxu0 0.0
        %1203 = vmatprep.subr.mxu0 0.0
        %1204 = vmatpush1.msra.mxu0 0.0
        %1205 = vmatprep.subr.mxu0 0.0
        %1206 = vmatpush1.msra.mxu0 0.0
        %1207 = vmatprep.subr.mxu0 0.0
        %1208 = vmatpush1.msra.mxu0 0.0
        %1209 = vmatprep.subr.mxu0 0.0
        %1210 = vmatpush1.msra.mxu0 0.0
        %1211 = vmatprep.subr.mxu0 0.0
        %1212 = vmatpush1.msra.mxu0 0.0
        %1213 = vmatprep.subr.mxu0 0.0
        %1214 = vmatpush1.msra.mxu0 0.0
        %1215 = vmatprep.subr.mxu0 0.0
        %1216 = vmatpush1.msra.mxu0 0.0
        %1217 = vmatprep.subr.mxu0 0.0
        %1218 = vmatpush1.msra.mxu0 0.0
        %1219 = vmatprep.subr.mxu0 0.0
        %1220 = vmatpush1.msra.mxu0 0.0
        %1221 = vmatprep.subr.mxu0 0.0
        %1222 = vmatpush1.msra.mxu0 0.0
        %1223 = vmatprep.subr.mxu0 0.0
        %1224 = vmatpush1.msra.mxu0 0.0
        %1225 = vmatprep.subr.mxu0 0.0
        %1226 = vmatpush1.msra.mxu0 0.0
        %1227 = vmatprep.mubr.f32.mxu0 0.0
        %v1228 = vand.u32 %v850, 4294901760
        %v1229 = vsub.f32 %v850, %v1228
        %v1230 = vand.u32 %v1229, 4294901760
        %1231 = vmatmul.mubr.f32.gmra.mrb[0].mxu0 %v1230
        %v1232 = vpop.f32.mrb[0].mxu0
        %v1233 = vadd.f32 %v1137, %v1232
        %v1234 = vpop.f32.mrb[0].mxu0
        %1235 = vmatprep.mubr.f32.mxu0 0.0
        %v1236 = vand.u32 %v852, 4294901760
        %v1237 = vsub.f32 %v852, %v1236
        %v1238 = vand.u32 %v1237, 4294901760
        %1239 = vmatmul.mubr.f32.gmra.mrb[0].mxu0 %v1238
        %v1240 = vpop.f32.mrb[0].mxu0
        %v1241 = vadd.f32 %v1144, %v1240
        %v1242 = vpop.f32.mrb[0].mxu0
        %1243 = vmatprep.mubr.f32.mxu0 0.0
        %v1244 = vand.u32 %v854, 4294901760
        %v1245 = vsub.f32 %v854, %v1244
        %v1246 = vand.u32 %v1245, 4294901760
        %1247 = vmatmul.mubr.f32.gmra.mrb[0].mxu0 %v1246
        %v1248 = vpop.f32.mrb[0].mxu0
        %v1249 = vadd.f32 %v1151, %v1248
        %v1250 = vpop.f32.mrb[0].mxu0
        %1251 = vmatprep.mubr.f32.mxu0 0.0
        %v1252 = vand.u32 %v856, 4294901760
        %v1253 = vsub.f32 %v856, %v1252
        %v1254 = vand.u32 %v1253, 4294901760
        %1255 = vmatmul.mubr.f32.gmra.mrb[0].mxu0 %v1254
        %v1256 = vpop.f32.mrb[0].mxu0
        %v1257 = vadd.f32 %v1158, %v1256
        %v1258 = vpop.f32.mrb[0].mxu0
        %1259 = vdwg.mxu0
        %1260 = vmatprep.subr.mxu0 0.0
        %v1261 = vand.u32 %v209, 4294901760
        %v1262 = vsub.f32 %v209, %v1261
        %v1263 = vand.u32 %v1262, 4294901760
        %1264 = vmatpush1.msra.mxu0 %v1263
        %1265 = vmatprep.subr.mxu0 0.0
        %v1266 = vand.u32 %v210, 4294901760
        %v1267 = vsub.f32 %v210, %v1266
        %v1268 = vand.u32 %v1267, 4294901760
        %1269 = vmatpush1.msra.mxu0 %v1268
        %1270 = vmatprep.subr.mxu0 0.0
        %1271 = vmatpush1.msra.mxu0 0.0
        %1272 = vmatprep.subr.mxu0 0.0
        %1273 = vmatpush1.msra.mxu0 0.0
        %1274 = vmatprep.subr.mxu0 0.0
        %1275 = vmatpush1.msra.mxu0 0.0
        %1276 = vmatprep.subr.mxu0 0.0
        %1277 = vmatpush1.msra.mxu0 0.0
        %1278 = vmatprep.subr.mxu0 0.0
        %1279 = vmatpush1.msra.mxu0 0.0
        %1280 = vmatprep.subr.mxu0 0.0
        %1281 = vmatpush1.msra.mxu0 0.0
        %1282 = vmatprep.subr.mxu0 0.0
        %1283 = vmatpush1.msra.mxu0 0.0
        %1284 = vmatprep.subr.mxu0 0.0
        %1285 = vmatpush1.msra.mxu0 0.0
        %1286 = vmatprep.subr.mxu0 0.0
        %1287 = vmatpush1.msra.mxu0 0.0
        %1288 = vmatprep.subr.mxu0 0.0
        %1289 = vmatpush1.msra.mxu0 0.0
        %1290 = vmatprep.subr.mxu0 0.0
        %1291 = vmatpush1.msra.mxu0 0.0
        %1292 = vmatprep.subr.mxu0 0.0
        %1293 = vmatpush1.msra.mxu0 0.0
        %1294 = vmatprep.subr.mxu0 0.0
        %1295 = vmatpush1.msra.mxu0 0.0
        %1296 = vmatprep.subr.mxu0 0.0
        %1297 = vmatpush1.msra.mxu0 0.0
        %1298 = vmatprep.subr.mxu0 0.0
        %1299 = vmatpush1.msra.mxu0 0.0
        %1300 = vmatprep.subr.mxu0 0.0
        %1301 = vmatpush1.msra.mxu0 0.0
        %1302 = vmatprep.subr.mxu0 0.0
        %1303 = vmatpush1.msra.mxu0 0.0
        %1304 = vmatprep.subr.mxu0 0.0
        %1305 = vmatpush1.msra.mxu0 0.0
        %1306 = vmatprep.subr.mxu0 0.0
        %1307 = vmatpush1.msra.mxu0 0.0
        %1308 = vmatprep.subr.mxu0 0.0
        %1309 = vmatpush1.msra.mxu0 0.0
        %1310 = vmatprep.subr.mxu0 0.0
        %1311 = vmatpush1.msra.mxu0 0.0
        %1312 = vmatprep.subr.mxu0 0.0
        %1313 = vmatpush1.msra.mxu0 0.0
        %1314 = vmatprep.subr.mxu0 0.0
        %1315 = vmatpush1.msra.mxu0 0.0
        %1316 = vmatprep.subr.mxu0 0.0
        %1317 = vmatpush1.msra.mxu0 0.0
        %1318 = vmatprep.subr.mxu0 0.0
        %1319 = vmatpush1.msra.mxu0 0.0
        %1320 = vmatprep.subr.mxu0 0.0
        %1321 = vmatpush1.msra.mxu0 0.0
        %1322 = vmatprep.subr.mxu0 0.0
        %1323 = vmatpush1.msra.mxu0 0.0
        %1324 = vmatprep.subr.mxu0 0.0
        %1325 = vmatpush1.msra.mxu0 0.0
        %1326 = vmatprep.subr.mxu0 0.0
        %1327 = vmatpush1.msra.mxu0 0.0
        %1328 = vmatprep.subr.mxu0 0.0
        %1329 = vmatpush1.msra.mxu0 0.0
        %1330 = vmatprep.mubr.f32.mxu0 0.0
        %v1331 = vand.u32 %v850, 4294901760
        %1332 = vmatmul.mubr.f32.gmra.mrb[0].mxu0 %v1331
        %v1333 = vpop.f32.mrb[0].mxu0
        %v1334 = vadd.f32 %v1233, %v1333
        %v1335 = vpop.f32.mrb[0].mxu0
        %1336 = vmatprep.mubr.f32.mxu0 0.0
        %v1337 = vand.u32 %v852, 4294901760
        %1338 = vmatmul.mubr.f32.gmra.mrb[0].mxu0 %v1337
        %v1339 = vpop.f32.mrb[0].mxu0
        %v1340 = vadd.f32 %v1241, %v1339
        %v1341 = vpop.f32.mrb[0].mxu0
        %1342 = vmatprep.mubr.f32.mxu0 0.0
        %v1343 = vand.u32 %v854, 4294901760
        %1344 = vmatmul.mubr.f32.gmra.mrb[0].mxu0 %v1343
        %v1345 = vpop.f32.mrb[0].mxu0
        %v1346 = vadd.f32 %v1249, %v1345
        %v1347 = vpop.f32.mrb[0].mxu0
        %1348 = vmatprep.mubr.f32.mxu0 0.0
        %v1349 = vand.u32 %v856, 4294901760
        %1350 = vmatmul.mubr.f32.gmra.mrb[0].mxu0 %v1349
        %v1351 = vpop.f32.mrb[0].mxu0
        %v1352 = vadd.f32 %v1257, %v1351
        %v1353 = vpop.f32.mrb[0].mxu0
        %1354 = vdwg.mxu0
        %1355 = vmatprep.subr.mxu0 0.0
        %v1356 = vand.u32 %v209, 4294901760
        %1357 = vmatpush1.msra.mxu0 %v1356
        %1358 = vmatprep.subr.mxu0 0.0
        %v1359 = vand.u32 %v210, 4294901760
        %1360 = vmatpush1.msra.mxu0 %v1359
        %1361 = vmatprep.subr.mxu0 0.0
        %1362 = vmatpush1.msra.mxu0 0.0
        %1363 = vmatprep.subr.mxu0 0.0
        %1364 = vmatpush1.msra.mxu0 0.0
        %1365 = vmatprep.subr.mxu0 0.0
        %1366 = vmatpush1.msra.mxu0 0.0
        %1367 = vmatprep.subr.mxu0 0.0
        %1368 = vmatpush1.msra.mxu0 0.0
        %1369 = vmatprep.subr.mxu0 0.0
        %1370 = vmatpush1.msra.mxu0 0.0
        %1371 = vmatprep.subr.mxu0 0.0
        %1372 = vmatpush1.msra.mxu0 0.0
        %1373 = vmatprep.subr.mxu0 0.0
        %1374 = vmatpush1.msra.mxu0 0.0
        %1375 = vmatprep.subr.mxu0 0.0
        %1376 = vmatpush1.msra.mxu0 0.0
        %1377 = vmatprep.subr.mxu0 0.0
        %1378 = vmatpush1.msra.mxu0 0.0
        %1379 = vmatprep.subr.mxu0 0.0
        %1380 = vmatpush1.msra.mxu0 0.0
        %1381 = vmatprep.subr.mxu0 0.0
        %1382 = vmatpush1.msra.mxu0 0.0
        %1383 = vmatprep.subr.mxu0 0.0
        %1384 = vmatpush1.msra.mxu0 0.0
        %1385 = vmatprep.subr.mxu0 0.0
        %1386 = vmatpush1.msra.mxu0 0.0
        %1387 = vmatprep.subr.mxu0 0.0
        %1388 = vmatpush1.msra.mxu0 0.0
        %1389 = vmatprep.subr.mxu0 0.0
        %1390 = vmatpush1.msra.mxu0 0.0
        %1391 = vmatprep.subr.mxu0 0.0
        %1392 = vmatpush1.msra.mxu0 0.0
        %1393 = vmatprep.subr.mxu0 0.0
        %1394 = vmatpush1.msra.mxu0 0.0
        %1395 = vmatprep.subr.mxu0 0.0
        %1396 = vmatpush1.msra.mxu0 0.0
        %1397 = vmatprep.subr.mxu0 0.0
        %1398 = vmatpush1.msra.mxu0 0.0
        %1399 = vmatprep.subr.mxu0 0.0
        %1400 = vmatpush1.msra.mxu0 0.0
        %1401 = vmatprep.subr.mxu0 0.0
        %1402 = vmatpush1.msra.mxu0 0.0
        %1403 = vmatprep.subr.mxu0 0.0
        %1404 = vmatpush1.msra.mxu0 0.0
        %1405 = vmatprep.subr.mxu0 0.0
        %1406 = vmatpush1.msra.mxu0 0.0
        %1407 = vmatprep.subr.mxu0 0.0
        %1408 = vmatpush1.msra.mxu0 0.0
        %1409 = vmatprep.subr.mxu0 0.0
        %1410 = vmatpush1.msra.mxu0 0.0
        %1411 = vmatprep.subr.mxu0 0.0
        %1412 = vmatpush1.msra.mxu0 0.0
        %1413 = vmatprep.subr.mxu0 0.0
        %1414 = vmatpush1.msra.mxu0 0.0
        %1415 = vmatprep.subr.mxu0 0.0
        %1416 = vmatpush1.msra.mxu0 0.0
        %1417 = vmatprep.subr.mxu0 0.0
        %1418 = vmatpush1.msra.mxu0 0.0
        %1419 = vmatprep.subr.mxu0 0.0
        %1420 = vmatpush1.msra.mxu0 0.0
        %1421 = vmatprep.mubr.f32.mxu0 0.0
        %v1422 = vand.u32 %v850, 4294901760
        %1423 = vmatmul.mubr.f32.gmra.mrb[0].mxu0 %v1422
        %v1424 = vpop.f32.mrb[0].mxu0
        %v1425 = vadd.f32 %v1334, %v1424
        %v1426 = vpop.f32.mrb[0].mxu0
        %1427 = vmatprep.mubr.f32.mxu0 0.0
        %v1428 = vand.u32 %v852, 4294901760
        %1429 = vmatmul.mubr.f32.gmra.mrb[0].mxu0 %v1428
        %v1430 = vpop.f32.mrb[0].mxu0
        %v1431 = vadd.f32 %v1340, %v1430
        %v1432 = vpop.f32.mrb[0].mxu0
        %1433 = vmatprep.mubr.f32.mxu0 0.0
        %v1434 = vand.u32 %v854, 4294901760
        %1435 = vmatmul.mubr.f32.gmra.mrb[0].mxu0 %v1434
        %v1436 = vpop.f32.mrb[0].mxu0
        %v1437 = vadd.f32 %v1346, %v1436
        %v1438 = vpop.f32.mrb[0].mxu0
        %1439 = vmatprep.mubr.f32.mxu0 0.0
        %v1440 = vand.u32 %v856, 4294901760
        %1441 = vmatmul.mubr.f32.gmra.mrb[0].mxu0 %v1440
        %v1442 = vpop.f32.mrb[0].mxu0
        %v1443 = vadd.f32 %v1352, %v1442
        %v1444 = vpop.f32.mrb[0].mxu0
        %1445 = vdwg.mxu0
        %s1446 = scalar_lea.vmem %s206, 16 [#allocation7]
        %1447 = vst.msk [vmem:[%s1446] sm:$0xff] %vm816, %v1425
        %1448 = vst.msk [vmem:[%s1446 + $0x20] sm:$0xff] %vm816, %v1431
        %1449 = vst.msk [vmem:[%s1446 + $0x40] sm:$0xff] %vm816, %v1437
        %1450 = vst.msk [vmem:[%s1446 + $0x60] sm:$0xff] %vm816, %v1443
        %1455 = vrot.lane.b32.xlu0 %v1425, 120
        %v1456 = vpop.permute.xlu0 %1455
        %1457 = vrot.lane.b32.xlu0 %v1431, 120
        %v1458 = vpop.permute.xlu0 %1457
        %1459 = vrot.lane.b32.xlu0 %v1437, 120
        %v1460 = vpop.permute.xlu0 %1459
        %1461 = vrot.lane.b32.xlu0 %v1443, 120
        %v1462 = vpop.permute.xlu0 %1461
        %s1467 = scalar_lea.vmem %s206, 24 [#allocation7]
        %1468 = vst.msk [vmem:[%s1467] sm:$0xff] %vm816, %v1456
        %1469 = vst.msk [vmem:[%s1467 + $0x20] sm:$0xff] %vm816, %v1458
        %1470 = vst.msk [vmem:[%s1467 + $0x40] sm:$0xff] %vm816, %v1460
        %1471 = vst.msk [vmem:[%s1467 + $0x60] sm:$0xff] %vm816, %v1462
        %s1472 = sand.u32 %s102, 1
        %s1473 = scalar_lea.sflag [#allocation4], %s1472
        %s1474 = sand.u32 %s102, 1
        %s1475 = smul.addr %s1474, 128
        %s1476 = scalar_lea.vmem [#allocation7], %s1475
        // Predicated region
        $region37: #{tpu_custom_call.1} parent=27 // pred_check
          %p1477 = pneg %p112
        $region38: #{tpu_custom_call.1} parent=27 // pred_check_branch
          %1479 = sbr.rel (%p1477) target = $region40
        $region39: #{tpu_custom_call.1} parent=27 // pred_region
          %s1480 = smul.u32 4, %s26
          %s1482 = ssub.s32 2048, 2048
          %1483 = vsyncadd %s1473, %s1482
          %s1484 = smul.addr %s1480, 4
          %s1485 = sadd.s32 %s27, %s1484
          %s1486 = smul.addr %s25, 16
          %s1487 = sadd.s32 %s1485, %s1486
          %s1488 = smul.addr %s1487, 128
          %s1489 = scalar_lea.hbm %s2, %s1488
          %s1490 = sshll.u32 %s1476, 4
          %s1491 = int_to_ptr.vmem [resolvable:$true] %s1490
          %1496 = dma.vmem_to_hbm [thread:$0]  %s1491, 2048, %s1489, %s1473, 128, 128, 8
        $region40: #{tpu_custom_call.1} parent=27 // pred_fallthru
          _
      $region28: #{tpu_custom_call.1} parent=5 // pred_fallthru
        _
      %p1497 = scmp.le.s32.totalorder 2, %s15
      // Predicated region
      $region41: #{tpu_custom_call.1} parent=5 // pred_check
        %p1498 = pneg %p1497
      $region42: #{tpu_custom_call.1} parent=5 // pred_check_branch
        %1500 = sbr.rel (%p1498) target = $region44
      $region43: #{tpu_custom_call.1} parent=5 // pred_region
        %s1501 = ssub.s32 %s15, 2
        // Predicated region
        $region45: #{tpu_custom_call.1} parent=43 // pred_check
          %p1502 = pneg %p118
        $region46: #{tpu_custom_call.1} parent=43 // pred_check_branch
          %1504 = sbr.rel (%p1502) target = $region48
        $region47: #{tpu_custom_call.1} parent=43 // pred_region
          %s1505 = sand.u32 %s103, 1
          %s1506 = scalar_lea.sflag [#allocation4], %s1505
          %s1507 = sand.u32 %s103, 1
          %s1508 = smul.addr %s1507, 128
          %s1509 = scalar_lea.vmem [#allocation7], %s1508
          %1510 = dma.done %s1506, 2048
        $region48: #{tpu_custom_call.1} parent=43 // pred_fallthru
          _
      $region44: #{tpu_custom_call.1} parent=5 // pred_fallthru
        _
    $region6: #{tpu_custom_call.1} parent=1 // loop_footer
      %s19 = sadd.s32 1, %s15
    $region7: #{tpu_custom_call.1} parent=1 // loop_footer_branch
      %14 = sbr.rel target = $region3
    $region8: #{tpu_custom_call.1} parent=1 // loop_exit
      _
    %1511 = vsyncpa [#allocation3], 1
    %s1512 = scalar_lea.sflag [#allocation3], 1
    %1513 = vsyncpa %s1512, 1
    %1514 = vsyncpa [#allocation6], 1
    %1515 = vsyncpa [#allocation4], 1
    %s1516 = scalar_lea.sflag [#allocation4], 1
    %1517 = vsyncpa %s1516, 1

</llo_original>
